<compile_context>
chip_gen: v7x
topology: tpu7x:2x2x1
jax: 0.10.0
libtpu: 0.0.40
codegen_flags: <defaults>
</compile_context>

<pallas_src>
import functools

import jax
import jax.numpy as jnp
import numpy as np
from jax.experimental import pallas as pl
from jax.experimental.pallas import tpu as pltpu

_EPS = 1e-5


def _double_conv_kernel(x_ref, m1_ref, g1_ref, b1_ref, m2_ref, g2_ref, b2_ref,
                        pool_ref, spread_ref, out_ref, xpad_ref, y1pad_ref, *, cout):
    """Fused (conv3x3 -> BN(batch stats) -> ReLU) x 2 on lane-packed activations.

    x_ref:      (N, H, W*Cin)             lane-packed input (no halo)
    m*_ref:     (3, W*C_in_stage, W*Cout) per-dh packed weights; dw taps + W zero
                                          padding folded into the block matrix
    g*/b*:      (1, Cout)                 BN affine params
    pool_ref:   (W*Cout, Cout)            one-hot lane -> channel pooling matrix
    spread_ref: (Cout, W*Cout)            its transpose (channel -> lane broadcast)
    out_ref:    (N, H, W*Cout)            lane-dense output
    xpad/y1pad: (N, H+2, W*C)             VMEM scratch, H-halo only (no lane halo)
    """
    n, h, _ = x_ref.shape
    nh = n * h
    l_out = out_ref.shape[-1]
    inv_cnt = 1.0 / float(n * h * (l_out // cout))          # 1 / (N*H*W)

    def fill_padded(pad_ref, y_nhl):
        # Zero ONLY the two H-halo rows; interior rows get one dense store.
        lsrc = pad_ref.shape[-1]
        pad_ref[:, 0:1, :] = jnp.zeros((n, 1, lsrc), jnp.float32)
        pad_ref[:, h + 1:h + 2, :] = jnp.zeros((n, 1, lsrc), jnp.float32)
        pad_ref[:, 1:h + 1, :] = y_nhl

    def conv3x3(pad_ref, m_ref):
        # out[(n,h), w*Cout+co] = sum_dh  pad[(n, h+dh), :] @ M[dh]
        lsrc = pad_ref.shape[-1]
        acc = None
        for dh in range(3):                                  # 3 MXU matmuls, K = W*C_in
            xs = pad_ref[:, dh:dh + h, :].reshape(nh, lsrc)  # shifted ref window
            contrib = jnp.dot(xs, m_ref[dh], preferred_element_type=jnp.float32)
            acc = contrib if acc is None else acc + contrib
        return acc                                           # (N*H, W*Cout) f32

    def bn_relu(acc, g_ref, b_ref):
        # One-pass batch stats: per-lane sums (sublane reduce), pooled to channels via
        # the precomputed one-hot constants, folded into one per-lane FMA + ReLU.
        s_p = jnp.sum(acc, axis=0, keepdims=True)            # (1, W*Cout)
        ss_p = jnp.sum(acc * acc, axis=0, keepdims=True)     # (1, W*Cout)
        s_c = jnp.dot(s_p, pool_ref[...], preferred_element_type=jnp.float32)
        ss_c = jnp.dot(ss_p, pool_ref[...], preferred_element_type=jnp.float32)
        mean = s_c * inv_cnt
        var = ss_c * inv_cnt - mean * mean                   # biased (training mode)
        scale_c = jax.lax.rsqrt(var + _EPS) * g_ref[...]
        shift_c = b_ref[...] - mean * scale_c
        scale_p = jnp.dot(scale_c, spread_ref[...], preferred_element_type=jnp.float32)
        shift_p = jnp.dot(shift_c, spread_ref[...], preferred_element_type=jnp.float32)
        return jnp.maximum(acc * scale_p + shift_p, 0.0)     # (N*H, W*Cout)

    # Stage 1: conv(Cin -> Cout) + BN + ReLU
    fill_padded(xpad_ref, x_ref[...].astype(jnp.float32))
    y1 = bn_relu(conv3x3(xpad_ref, m1_ref), g1_ref, b1_ref)

    # Stage 2: conv(Cout -> Cout) + BN + ReLU (intermediate never leaves VMEM)
    fill_padded(y1pad_ref, y1.reshape(n, h, l_out))
    y2 = bn_relu(conv3x3(y1pad_ref, m2_ref), g2_ref, b2_ref)

    out_ref[...] = y2.reshape(n, h, l_out).astype(out_ref.dtype)


def _pack_conv_weights(w_oihw, width):
    """OIHW 3x3 weights -> (3, width*Cin, width*Cout) lane-packed block matrices.

    M[dh, wi*Cin + ci, wo*Cout + co] = w[co, ci, dh, dw] with wi = wo + dw - 1; taps
    whose input column falls outside [0, width) are simply absent (zero rows), i.e.
    the conv's left/right zero padding is baked into the weights (no lane halo).
    Runs once at model build time (host numpy), not in the per-call path.
    """
    w = np.asarray(w_oihw, np.float32)
    cout, cin, kh, kw = w.shape
    m = np.zeros((kh, width * cin, width * cout), np.float32)
    for dh in range(kh):
        for dw in range(kw):
            tap = w[:, :, dh, dw].T                           # (Cin, Cout)
            for wo in range(width):
                wi = wo + dw - 1
                if 0 <= wi < width:
                    m[dh, wi * cin:(wi + 1) * cin, wo * cout:(wo + 1) * cout] = tap
    return jnp.asarray(m)


def build_double_conv(w1_oihw, g1, b1, w2_oihw, g2, b2, height, width):
    """Packs static parameters once; returns a jitted forward(x_nchw) -> NCHW."""
    cout, cin = int(w1_oihw.shape[0]), int(w1_oihw.shape[1])
    l_in, l_out = width * cin, width * cout

    m1 = _pack_conv_weights(w1_oihw, width)                   # (3, W*Cin,  W*Cout)
    m2 = _pack_conv_weights(w2_oihw, width)                   # (3, W*Cout, W*Cout)
    pool_np = np.zeros((l_out, cout), np.float32)
    pool_np[np.arange(l_out), np.arange(l_out) % cout] = 1.0
    pool = jnp.asarray(pool_np)                               # (W*Cout, Cout)
    spread = jnp.asarray(np.ascontiguousarray(pool_np.T))     # (Cout, W*Cout)
    g1r = jnp.asarray(g1, jnp.float32).reshape(1, cout)
    b1r = jnp.asarray(b1, jnp.float32).reshape(1, cout)
    g2r = jnp.asarray(g2, jnp.float32).reshape(1, cout)
    b2r = jnp.asarray(b2, jnp.float32).reshape(1, cout)

    kernel = functools.partial(_double_conv_kernel, cout=cout)
    vmem = pl.BlockSpec(memory_space=pltpu.MemorySpace.VMEM)

    @jax.jit
    def forward(x_nchw):
        n = x_nchw.shape[0]
        # Layout plumbing only: NCHW -> lane-packed (N, H, W*Cin).
        x = jnp.transpose(x_nchw, (0, 2, 3, 1)).reshape(n, height, l_in)
        out = pl.pallas_call(
            kernel,
            out_shape=jax.ShapeDtypeStruct((n, height, l_out), x_nchw.dtype),
            in_specs=[vmem] * 9,
            out_specs=vmem,
            scratch_shapes=[
                pltpu.VMEM((n, height + 2, l_in), jnp.float32),   # H-padded input
                pltpu.VMEM((n, height + 2, l_out), jnp.float32),  # H-padded stage-1 out
            ],
        )(x, m1, g1r, b1r, m2, g2r, b2r, pool, spread)
        return jnp.transpose(out.reshape(n, height, width, cout), (0, 3, 1, 2))

    return forward


def _reference(x_nchw, w1_oihw, g1, b1, w2_oihw, g2, b2):
    """Pure-JAX reference (NCHW) matching PyTorch training-mode semantics."""
    def block(x, wgt, g, b):
        y = jax.lax.conv_general_dilated(
            x, wgt, window_strides=(1, 1), padding=((1, 1), (1, 1)),
            dimension_numbers=("NCHW", "OIHW", "NCHW"))
        mean = jnp.mean(y, axis=(0, 2, 3), keepdims=True)
        var = jnp.mean((y - mean) ** 2, axis=(0, 2, 3), keepdims=True)
        y = (y - mean) * jax.lax.rsqrt(var + _EPS)
        y = y * g.reshape(1, -1, 1, 1) + b.reshape(1, -1, 1, 1)
        return jnp.maximum(y, 0.0)
    return block(block(x_nchw, w1_oihw, g1, b1), w2_oihw, g2, b2)


if __name__ == "__main__":
    key = jax.random.PRNGKey(0)
    k_x, k_w1, k_w2 = jax.random.split(key, 3)

    N, C_in, C_out, H, W = 2, 4, 8, 16, 16

    x = jax.random.normal(k_x, (N, C_in, H, W), jnp.float32)
    # Conv2d weights (bias=False): PyTorch shape (out, in, 3, 3); deterministic init.
    w1 = jax.random.normal(k_w1, (C_out, C_in, 3, 3), jnp.float32) * 0.1
    w2 = jax.random.normal(k_w2, (C_out, C_out, 3, 3), jnp.float32) * 0.1
    # BatchNorm2d default init: gamma=1, beta=0.
    g1 = jnp.ones((C_out,), jnp.float32)
    b1 = jnp.zeros((C_out,), jnp.float32)
    g2 = jnp.ones((C_out,), jnp.float32)
    b2 = jnp.zeros((C_out,), jnp.float32)

    forward = build_double_conv(w1, g1, b1, w2, g2, b2, H, W)   # packs weights once
    out = jax.block_until_ready(forward(x))

    ref = _reference(x, w1, g1, b1, w2, g2, b2)
    assert out.shape == (N, C_out, H, W)
    # Everything is f32 with f32 accumulation; 2e-3 leaves headroom for the MXU/XLA
    # conv precision modes while still catching any real conv/BN bug.
    assert jnp.allclose(out, ref, atol=2e-3, rtol=2e-3)

    print("KERNEL_OK")
</pallas_src>

<mosaic_0001>
module attributes {stable_mosaic.version = 11 : i64} {
  func.func @_double_conv_kernel(%arg0: memref<2x16x64xf32, #tpu.memory_space<vmem>>, %arg1: memref<3x64x128xf32, #tpu.memory_space<vmem>>, %arg2: memref<1x8xf32, #tpu.memory_space<vmem>>, %arg3: memref<1x8xf32, #tpu.memory_space<vmem>>, %arg4: memref<3x128x128xf32, #tpu.memory_space<vmem>>, %arg5: memref<1x8xf32, #tpu.memory_space<vmem>>, %arg6: memref<1x8xf32, #tpu.memory_space<vmem>>, %arg7: memref<128x8xf32, #tpu.memory_space<vmem>>, %arg8: memref<8x128xf32, #tpu.memory_space<vmem>>, %arg9: memref<2x16x128xf32, #tpu.memory_space<vmem>>, %arg10: memref<2x18x64xf32, #tpu.memory_space<vmem>>, %arg11: memref<2x18x128xf32, #tpu.memory_space<vmem>>) attributes {dimension_semantics = [], scalar_prefetch = 0 : i64, scratch_operands = 2 : i64, tpu.core_type = #tpu.core_type<tc>} {
    %c0 = arith.constant 0 : index
    %c0_0 = arith.constant 0 : index
    %c0_1 = arith.constant 0 : index
    %0 = vector.load %arg0[%c0, %c0_0, %c0_1] : memref<2x16x64xf32, #tpu.memory_space<vmem>>, vector<2x16x64xf32>
    %cst = arith.constant 0.000000e+00 : f32
    %1 = vector.broadcast %cst : f32 to vector<2x1x64xf32>
    %c0_2 = arith.constant 0 : index
    %c0_3 = arith.constant 0 : index
    %c0_4 = arith.constant 0 : index
    %2 = vector.load %arg10[%c0_2, %c0_3, %c0_4] : memref<2x18x64xf32, #tpu.memory_space<vmem>>, vector<2x1x64xf32>
    tpu.vector_store %arg10[%c0_2, %c0_3, %c0_4], %1 {strides = array<i32>} : memref<2x18x64xf32, #tpu.memory_space<vmem>>, vector<2x1x64xf32>,
    %cst_5 = arith.constant 0.000000e+00 : f32
    %3 = vector.broadcast %cst_5 : f32 to vector<2x1x64xf32>
    %c0_6 = arith.constant 0 : index
    %c17 = arith.constant 17 : index
    %c0_7 = arith.constant 0 : index
    %4 = vector.load %arg10[%c0_6, %c17, %c0_7] : memref<2x18x64xf32, #tpu.memory_space<vmem>>, vector<2x1x64xf32>
    tpu.vector_store %arg10[%c0_6, %c17, %c0_7], %3 {strides = array<i32>} : memref<2x18x64xf32, #tpu.memory_space<vmem>>, vector<2x1x64xf32>,
    %c0_8 = arith.constant 0 : index
    %c1 = arith.constant 1 : index
    %c0_9 = arith.constant 0 : index
    %5 = vector.load %arg10[%c0_8, %c1, %c0_9] : memref<2x18x64xf32, #tpu.memory_space<vmem>>, vector<2x16x64xf32>
    tpu.vector_store %arg10[%c0_8, %c1, %c0_9], %0 {strides = array<i32>} : memref<2x18x64xf32, #tpu.memory_space<vmem>>, vector<2x16x64xf32>,
    %c0_10 = arith.constant 0 : index
    %c0_11 = arith.constant 0 : index
    %c0_12 = arith.constant 0 : index
    %6 = vector.load %arg10[%c0_10, %c0_11, %c0_12] : memref<2x18x64xf32, #tpu.memory_space<vmem>>, vector<2x16x64xf32>
    %7 = vector.shape_cast %6 : vector<2x16x64xf32> to vector<32x64xf32>
    %c0_13 = arith.constant 0 : index
    %c0_14 = arith.constant 0 : index
    %c0_15 = arith.constant 0 : index
    %8 = vector.load %arg1[%c0_13, %c0_14, %c0_15] : memref<3x64x128xf32, #tpu.memory_space<vmem>>, vector<1x64x128xf32>
    %9 = vector.shape_cast %8 : vector<1x64x128xf32> to vector<64x128xf32>
    %cst_16 = arith.constant dense<0.000000e+00> : vector<32x128xf32>
    %10 = tpu.matmul %7, %9, %cst_16 {dimension_numbers = #tpu.dot_dimension_numbers<[1], [0], [0], [1], [0, 0, 1, 1], [], []>} : vector<32x64xf32>, vector<64x128xf32>, vector<32x128xf32> -> vector<32x128xf32>
    %c0_17 = arith.constant 0 : index
    %c1_18 = arith.constant 1 : index
    %c0_19 = arith.constant 0 : index
    %11 = vector.load %arg10[%c0_17, %c1_18, %c0_19] : memref<2x18x64xf32, #tpu.memory_space<vmem>>, vector<2x16x64xf32>
    %12 = vector.shape_cast %11 : vector<2x16x64xf32> to vector<32x64xf32>
    %c1_20 = arith.constant 1 : index
    %c0_21 = arith.constant 0 : index
    %c0_22 = arith.constant 0 : index
    %13 = vector.load %arg1[%c1_20, %c0_21, %c0_22] : memref<3x64x128xf32, #tpu.memory_space<vmem>>, vector<1x64x128xf32>
    %14 = vector.shape_cast %13 : vector<1x64x128xf32> to vector<64x128xf32>
    %cst_23 = arith.constant dense<0.000000e+00> : vector<32x128xf32>
    %15 = tpu.matmul %12, %14, %cst_23 {dimension_numbers = #tpu.dot_dimension_numbers<[1], [0], [0], [1], [0, 0, 1, 1], [], []>} : vector<32x64xf32>, vector<64x128xf32>, vector<32x128xf32> -> vector<32x128xf32>
    %16 = arith.addf %10, %15 : vector<32x128xf32>
    %c0_24 = arith.constant 0 : index
    %c2 = arith.constant 2 : index
    %c0_25 = arith.constant 0 : index
    %17 = vector.load %arg10[%c0_24, %c2, %c0_25] : memref<2x18x64xf32, #tpu.memory_space<vmem>>, vector<2x16x64xf32>
    %18 = vector.shape_cast %17 : vector<2x16x64xf32> to vector<32x64xf32>
    %c2_26 = arith.constant 2 : index
    %c0_27 = arith.constant 0 : index
    %c0_28 = arith.constant 0 : index
    %19 = vector.load %arg1[%c2_26, %c0_27, %c0_28] : memref<3x64x128xf32, #tpu.memory_space<vmem>>, vector<1x64x128xf32>
    %20 = vector.shape_cast %19 : vector<1x64x128xf32> to vector<64x128xf32>
    %cst_29 = arith.constant dense<0.000000e+00> : vector<32x128xf32>
    %21 = tpu.matmul %18, %20, %cst_29 {dimension_numbers = #tpu.dot_dimension_numbers<[1], [0], [0], [1], [0, 0, 1, 1], [], []>} : vector<32x64xf32>, vector<64x128xf32>, vector<32x128xf32> -> vector<32x128xf32>
    %22 = arith.addf %16, %21 : vector<32x128xf32>
    %cst_30 = arith.constant dense<0.000000e+00> : vector<128xf32>
    %23 = vector.multi_reduction <add>, %22, %cst_30 [0] : vector<32x128xf32> to vector<128xf32>
    %24 = vector.shape_cast %23 : vector<128xf32> to vector<1x128xf32>
    %25 = arith.mulf %22, %22 : vector<32x128xf32>
    %cst_31 = arith.constant dense<0.000000e+00> : vector<128xf32>
    %26 = vector.multi_reduction <add>, %25, %cst_31 [0] : vector<32x128xf32> to vector<128xf32>
    %27 = vector.shape_cast %26 : vector<128xf32> to vector<1x128xf32>
    %c0_32 = arith.constant 0 : index
    %c0_33 = arith.constant 0 : index
    %28 = vector.load %arg7[%c0_32, %c0_33] : memref<128x8xf32, #tpu.memory_space<vmem>>, vector<128x8xf32>
    %cst_34 = arith.constant dense<0.000000e+00> : vector<1x8xf32>
    %29 = tpu.matmul %24, %28, %cst_34 {dimension_numbers = #tpu.dot_dimension_numbers<[1], [0], [0], [1], [0, 0, 1, 1], [], []>} : vector<1x128xf32>, vector<128x8xf32>, vector<1x8xf32> -> vector<1x8xf32>
    %c0_35 = arith.constant 0 : index
    %c0_36 = arith.constant 0 : index
    %30 = vector.load %arg7[%c0_35, %c0_36] : memref<128x8xf32, #tpu.memory_space<vmem>>, vector<128x8xf32>
    %cst_37 = arith.constant dense<0.000000e+00> : vector<1x8xf32>
    %31 = tpu.matmul %27, %30, %cst_37 {dimension_numbers = #tpu.dot_dimension_numbers<[1], [0], [0], [1], [0, 0, 1, 1], [], []>} : vector<1x128xf32>, vector<128x8xf32>, vector<1x8xf32> -> vector<1x8xf32>
    %cst_38 = arith.constant 0.001953125 : f32
    %32 = vector.broadcast %cst_38 : f32 to vector<1x8xf32>
    %33 = arith.mulf %29, %32 : vector<1x8xf32>
    %cst_39 = arith.constant 0.001953125 : f32
    %34 = vector.broadcast %cst_39 : f32 to vector<1x8xf32>
    %35 = arith.mulf %31, %34 : vector<1x8xf32>
    %36 = arith.mulf %33, %33 : vector<1x8xf32>
    %37 = arith.subf %35, %36 : vector<1x8xf32>
    %cst_40 = arith.constant 9.99999974E-6 : f32
    %38 = vector.broadcast %cst_40 : f32 to vector<1x8xf32>
    %39 = arith.addf %37, %38 : vector<1x8xf32>
    %40 = math.rsqrt %39 : vector<1x8xf32>
    %c0_41 = arith.constant 0 : index
    %c0_42 = arith.constant 0 : index
    %41 = vector.load %arg2[%c0_41, %c0_42] : memref<1x8xf32, #tpu.memory_space<vmem>>, vector<1x8xf32>
    %42 = arith.mulf %40, %41 : vector<1x8xf32>
    %c0_43 = arith.constant 0 : index
    %c0_44 = arith.constant 0 : index
    %43 = vector.load %arg3[%c0_43, %c0_44] : memref<1x8xf32, #tpu.memory_space<vmem>>, vector<1x8xf32>
    %44 = arith.mulf %33, %42 : vector<1x8xf32>
    %45 = arith.subf %43, %44 : vector<1x8xf32>
    %c0_45 = arith.constant 0 : index
    %c0_46 = arith.constant 0 : index
    %46 = vector.load %arg8[%c0_45, %c0_46] : memref<8x128xf32, #tpu.memory_space<vmem>>, vector<8x128xf32>
    %cst_47 = arith.constant dense<0.000000e+00> : vector<1x128xf32>
    %47 = tpu.matmul %42, %46, %cst_47 {dimension_numbers = #tpu.dot_dimension_numbers<[1], [0], [0], [1], [0, 0, 1, 1], [], []>} : vector<1x8xf32>, vector<8x128xf32>, vector<1x128xf32> -> vector<1x128xf32>
    %c0_48 = arith.constant 0 : index
    %c0_49 = arith.constant 0 : index
    %48 = vector.load %arg8[%c0_48, %c0_49] : memref<8x128xf32, #tpu.memory_space<vmem>>, vector<8x128xf32>
    %cst_50 = arith.constant dense<0.000000e+00> : vector<1x128xf32>
    %49 = tpu.matmul %45, %48, %cst_50 {dimension_numbers = #tpu.dot_dimension_numbers<[1], [0], [0], [1], [0, 0, 1, 1], [], []>} : vector<1x8xf32>, vector<8x128xf32>, vector<1x128xf32> -> vector<1x128xf32>
    %50 = vector.broadcast %47 : vector<1x128xf32> to vector<32x128xf32>
    %51 = arith.mulf %22, %50 : vector<32x128xf32>
    %52 = vector.broadcast %49 : vector<1x128xf32> to vector<32x128xf32>
    %53 = arith.addf %51, %52 : vector<32x128xf32>
    %cst_51 = arith.constant 0.000000e+00 : f32
    %54 = vector.broadcast %cst_51 : f32 to vector<32x128xf32>
    %55 = arith.maximumf %53, %54 : vector<32x128xf32>
    %56 = vector.shape_cast %55 : vector<32x128xf32> to vector<2x16x128xf32>
    %cst_52 = arith.constant 0.000000e+00 : f32
    %57 = vector.broadcast %cst_52 : f32 to vector<2x1x128xf32>
    %c0_53 = arith.constant 0 : index
    %c0_54 = arith.constant 0 : index
    %c0_55 = arith.constant 0 : index
    %58 = vector.load %arg11[%c0_53, %c0_54, %c0_55] : memref<2x18x128xf32, #tpu.memory_space<vmem>>, vector<2x1x128xf32>
    tpu.vector_store %arg11[%c0_53, %c0_54, %c0_55], %57 {strides = array<i32>} : memref<2x18x128xf32, #tpu.memory_space<vmem>>, vector<2x1x128xf32>,
    %cst_56 = arith.constant 0.000000e+00 : f32
    %59 = vector.broadcast %cst_56 : f32 to vector<2x1x128xf32>
    %c0_57 = arith.constant 0 : index
    %c17_58 = arith.constant 17 : index
    %c0_59 = arith.constant 0 : index
    %60 = vector.load %arg11[%c0_57, %c17_58, %c0_59] : memref<2x18x128xf32, #tpu.memory_space<vmem>>, vector<2x1x128xf32>
    tpu.vector_store %arg11[%c0_57, %c17_58, %c0_59], %59 {strides = array<i32>} : memref<2x18x128xf32, #tpu.memory_space<vmem>>, vector<2x1x128xf32>,
    %c0_60 = arith.constant 0 : index
    %c1_61 = arith.constant 1 : index
    %c0_62 = arith.constant 0 : index
    %61 = vector.load %arg11[%c0_60, %c1_61, %c0_62] : memref<2x18x128xf32, #tpu.memory_space<vmem>>, vector<2x16x128xf32>
    tpu.vector_store %arg11[%c0_60, %c1_61, %c0_62], %56 {strides = array<i32>} : memref<2x18x128xf32, #tpu.memory_space<vmem>>, vector<2x16x128xf32>,
    %c0_63 = arith.constant 0 : index
    %c0_64 = arith.constant 0 : index
    %c0_65 = arith.constant 0 : index
    %62 = vector.load %arg11[%c0_63, %c0_64, %c0_65] : memref<2x18x128xf32, #tpu.memory_space<vmem>>, vector<2x16x128xf32>
    %63 = vector.shape_cast %62 : vector<2x16x128xf32> to vector<32x128xf32>
    %c0_66 = arith.constant 0 : index
    %c0_67 = arith.constant 0 : index
    %c0_68 = arith.constant 0 : index
    %64 = vector.load %arg4[%c0_66, %c0_67, %c0_68] : memref<3x128x128xf32, #tpu.memory_space<vmem>>, vector<1x128x128xf32>
    %65 = vector.shape_cast %64 : vector<1x128x128xf32> to vector<128x128xf32>
    %cst_69 = arith.constant dense<0.000000e+00> : vector<32x128xf32>
    %66 = tpu.matmul %63, %65, %cst_69 {dimension_numbers = #tpu.dot_dimension_numbers<[1], [0], [0], [1], [0, 0, 1, 1], [], []>} : vector<32x128xf32>, vector<128x128xf32>, vector<32x128xf32> -> vector<32x128xf32>
    %c0_70 = arith.constant 0 : index
    %c1_71 = arith.constant 1 : index
    %c0_72 = arith.constant 0 : index
    %67 = vector.load %arg11[%c0_70, %c1_71, %c0_72] : memref<2x18x128xf32, #tpu.memory_space<vmem>>, vector<2x16x128xf32>
    %68 = vector.shape_cast %67 : vector<2x16x128xf32> to vector<32x128xf32>
    %c1_73 = arith.constant 1 : index
    %c0_74 = arith.constant 0 : index
    %c0_75 = arith.constant 0 : index
    %69 = vector.load %arg4[%c1_73, %c0_74, %c0_75] : memref<3x128x128xf32, #tpu.memory_space<vmem>>, vector<1x128x128xf32>
    %70 = vector.shape_cast %69 : vector<1x128x128xf32> to vector<128x128xf32>
    %cst_76 = arith.constant dense<0.000000e+00> : vector<32x128xf32>
    %71 = tpu.matmul %68, %70, %cst_76 {dimension_numbers = #tpu.dot_dimension_numbers<[1], [0], [0], [1], [0, 0, 1, 1], [], []>} : vector<32x128xf32>, vector<128x128xf32>, vector<32x128xf32> -> vector<32x128xf32>
    %72 = arith.addf %66, %71 : vector<32x128xf32>
    %c0_77 = arith.constant 0 : index
    %c2_78 = arith.constant 2 : index
    %c0_79 = arith.constant 0 : index
    %73 = vector.load %arg11[%c0_77, %c2_78, %c0_79] : memref<2x18x128xf32, #tpu.memory_space<vmem>>, vector<2x16x128xf32>
    %74 = vector.shape_cast %73 : vector<2x16x128xf32> to vector<32x128xf32>
    %c2_80 = arith.constant 2 : index
    %c0_81 = arith.constant 0 : index
    %c0_82 = arith.constant 0 : index
    %75 = vector.load %arg4[%c2_80, %c0_81, %c0_82] : memref<3x128x128xf32, #tpu.memory_space<vmem>>, vector<1x128x128xf32>
    %76 = vector.shape_cast %75 : vector<1x128x128xf32> to vector<128x128xf32>
    %cst_83 = arith.constant dense<0.000000e+00> : vector<32x128xf32>
    %77 = tpu.matmul %74, %76, %cst_83 {dimension_numbers = #tpu.dot_dimension_numbers<[1], [0], [0], [1], [0, 0, 1, 1], [], []>} : vector<32x128xf32>, vector<128x128xf32>, vector<32x128xf32> -> vector<32x128xf32>
    %78 = arith.addf %72, %77 : vector<32x128xf32>
    %cst_84 = arith.constant dense<0.000000e+00> : vector<128xf32>
    %79 = vector.multi_reduction <add>, %78, %cst_84 [0] : vector<32x128xf32> to vector<128xf32>
    %80 = vector.shape_cast %79 : vector<128xf32> to vector<1x128xf32>
    %81 = arith.mulf %78, %78 : vector<32x128xf32>
    %cst_85 = arith.constant dense<0.000000e+00> : vector<128xf32>
    %82 = vector.multi_reduction <add>, %81, %cst_85 [0] : vector<32x128xf32> to vector<128xf32>
    %83 = vector.shape_cast %82 : vector<128xf32> to vector<1x128xf32>
    %c0_86 = arith.constant 0 : index
    %c0_87 = arith.constant 0 : index
    %84 = vector.load %arg7[%c0_86, %c0_87] : memref<128x8xf32, #tpu.memory_space<vmem>>, vector<128x8xf32>
    %cst_88 = arith.constant dense<0.000000e+00> : vector<1x8xf32>
    %85 = tpu.matmul %80, %84, %cst_88 {dimension_numbers = #tpu.dot_dimension_numbers<[1], [0], [0], [1], [0, 0, 1, 1], [], []>} : vector<1x128xf32>, vector<128x8xf32>, vector<1x8xf32> -> vector<1x8xf32>
    %c0_89 = arith.constant 0 : index
    %c0_90 = arith.constant 0 : index
    %86 = vector.load %arg7[%c0_89, %c0_90] : memref<128x8xf32, #tpu.memory_space<vmem>>, vector<128x8xf32>
    %cst_91 = arith.constant dense<0.000000e+00> : vector<1x8xf32>
    %87 = tpu.matmul %83, %86, %cst_91 {dimension_numbers = #tpu.dot_dimension_numbers<[1], [0], [0], [1], [0, 0, 1, 1], [], []>} : vector<1x128xf32>, vector<128x8xf32>, vector<1x8xf32> -> vector<1x8xf32>
    %cst_92 = arith.constant 0.001953125 : f32
    %88 = vector.broadcast %cst_92 : f32 to vector<1x8xf32>
    %89 = arith.mulf %85, %88 : vector<1x8xf32>
    %cst_93 = arith.constant 0.001953125 : f32
    %90 = vector.broadcast %cst_93 : f32 to vector<1x8xf32>
    %91 = arith.mulf %87, %90 : vector<1x8xf32>
    %92 = arith.mulf %89, %89 : vector<1x8xf32>
    %93 = arith.subf %91, %92 : vector<1x8xf32>
    %cst_94 = arith.constant 9.99999974E-6 : f32
    %94 = vector.broadcast %cst_94 : f32 to vector<1x8xf32>
    %95 = arith.addf %93, %94 : vector<1x8xf32>
    %96 = math.rsqrt %95 : vector<1x8xf32>
    %c0_95 = arith.constant 0 : index
    %c0_96 = arith.constant 0 : index
    %97 = vector.load %arg5[%c0_95, %c0_96] : memref<1x8xf32, #tpu.memory_space<vmem>>, vector<1x8xf32>
    %98 = arith.mulf %96, %97 : vector<1x8xf32>
    %c0_97 = arith.constant 0 : index
    %c0_98 = arith.constant 0 : index
    %99 = vector.load %arg6[%c0_97, %c0_98] : memref<1x8xf32, #tpu.memory_space<vmem>>, vector<1x8xf32>
    %100 = arith.mulf %89, %98 : vector<1x8xf32>
    %101 = arith.subf %99, %100 : vector<1x8xf32>
    %c0_99 = arith.constant 0 : index
    %c0_100 = arith.constant 0 : index
    %102 = vector.load %arg8[%c0_99, %c0_100] : memref<8x128xf32, #tpu.memory_space<vmem>>, vector<8x128xf32>
    %cst_101 = arith.constant dense<0.000000e+00> : vector<1x128xf32>
    %103 = tpu.matmul %98, %102, %cst_101 {dimension_numbers = #tpu.dot_dimension_numbers<[1], [0], [0], [1], [0, 0, 1, 1], [], []>} : vector<1x8xf32>, vector<8x128xf32>, vector<1x128xf32> -> vector<1x128xf32>
    %c0_102 = arith.constant 0 : index
    %c0_103 = arith.constant 0 : index
    %104 = vector.load %arg8[%c0_102, %c0_103] : memref<8x128xf32, #tpu.memory_space<vmem>>, vector<8x128xf32>
    %cst_104 = arith.constant dense<0.000000e+00> : vector<1x128xf32>
    %105 = tpu.matmul %101, %104, %cst_104 {dimension_numbers = #tpu.dot_dimension_numbers<[1], [0], [0], [1], [0, 0, 1, 1], [], []>} : vector<1x8xf32>, vector<8x128xf32>, vector<1x128xf32> -> vector<1x128xf32>
    %106 = vector.broadcast %103 : vector<1x128xf32> to vector<32x128xf32>
    %107 = arith.mulf %78, %106 : vector<32x128xf32>
    %108 = vector.broadcast %105 : vector<1x128xf32> to vector<32x128xf32>
    %109 = arith.addf %107, %108 : vector<32x128xf32>
    %cst_105 = arith.constant 0.000000e+00 : f32
    %110 = vector.broadcast %cst_105 : f32 to vector<32x128xf32>
    %111 = arith.maximumf %109, %110 : vector<32x128xf32>
    %112 = vector.shape_cast %111 : vector<32x128xf32> to vector<2x16x128xf32>
    %c0_106 = arith.constant 0 : index
    %c0_107 = arith.constant 0 : index
    %c0_108 = arith.constant 0 : index
    %113 = vector.load %arg9[%c0_106, %c0_107, %c0_108] : memref<2x16x128xf32, #tpu.memory_space<vmem>>, vector<2x16x128xf32>
    tpu.vector_store %arg9[%c0_106, %c0_107, %c0_108], %112 {strides = array<i32>} : memref<2x16x128xf32, #tpu.memory_space<vmem>>, vector<2x16x128xf32>,
    return
  }
}

</mosaic_0001>

<llo_original>
// kernel: forward.1
$region0: #{forward.1}
  #allocation0 [shape = 'u32[]', space=smem, size = 0x4, offset = 0x4, fixed_abs, tag = 'smem constant byte address 0x4 - core index']
  #allocation1 [shape = 'u32[144,128]{1,0:T(1,128)}', space=vmem, size = 0x12000, scoped, tag = 'internal scratch']
  #allocation2 [shape = 'f32[2,18,64]{2,1,0:T(8,128)}', space=vmem, size = 0x6000, scoped, tag = 'scratch operand']
  #allocation3 [shape = 'f32[2,18,128]{2,1,0:T(8,128)}', space=vmem, size = 0x6000, scoped, tag = 'scratch operand']
  %s0 = inlined_call_operand.vmem [shape: f32[2,16,64], index: 0, kind: input, shape index: {}]
  %s1 = inlined_call_operand.hbm [shape: f32[3,64,128], index: 1, kind: input, shape index: {}]
  %s2 = inlined_call_operand.vmem [shape: f32[1,8], index: 2, kind: input, shape index: {}, may-alias: {2,5}]
  %s3 = inlined_call_operand.vmem [shape: f32[1,8], index: 3, kind: input, shape index: {}, may-alias: {3,6}]
  %s4 = inlined_call_operand.vmem [shape: f32[3,128,128], index: 4, kind: input, shape index: {}]
  %s5 = inlined_call_operand.vmem [shape: f32[1,8], index: 5, kind: input, shape index: {}, may-alias: {2,5}]
  %s6 = inlined_call_operand.vmem [shape: f32[1,8], index: 6, kind: input, shape index: {}, may-alias: {3,6}]
  %s7 = inlined_call_operand.hbm [shape: f32[128,8], index: 7, kind: input, shape index: {}]
  %s8 = inlined_call_operand.vmem [shape: f32[8,128], index: 8, kind: input, shape index: {}]
  %s9 = inlined_call_operand.vmem [shape: f32[2,16,128], index: 9, kind: output, shape index: {}]
  %s10 = sld [smem:[#allocation0]]
  $region54: #{forward.1} parent=0
    _
  %s12 = ssub.s32 1, %s10
  %s13 = scalar_select 0, %s12, %s10
  $region1: #{forward.1} parent=0
    #allocation4 [shape = 'u8[98304]{0}', space=vmem, size = 0x18000, scoped, tag = 'input window, operand 1, single buffered']
    #allocation5 [shape = 's32[1]{0}', space=sflag, size = 0x4, scoped, tag = 'scoped memory for forward.1']
    #allocation6 [shape = 'u8[65536]{0}', space=vmem, size = 0x10000, scoped, tag = 'input window, operand 7, single buffered']
    #allocation7 [shape = 's32[1]{0}', space=sflag, size = 0x4, scoped, tag = 'scoped memory for forward.1']
    %14 = vsyncpa [#allocation5], 0
    %15 = vsyncpa [#allocation7], 0
    // Predicated region
    $region2: #{forward.1} parent=1 // pred_check
      _
    $region3: #{forward.1} parent=1 // pred_check_branch
      %17 = sbr.rel (0) target = $region5
    $region4: #{forward.1} parent=1 // pred_region
      _
    $region5: #{forward.1} parent=1 // pred_fallthru
      _
    // Predicated region
    $region6: #{forward.1} parent=1 // pred_check
      _
    $region7: #{forward.1} parent=1 // pred_check_branch
      %19 = sbr.rel (0) target = $region9
    $region8: #{forward.1} parent=1 // pred_region
      %s21 = ssub.s32 3072, 3072
      %22 = vsyncadd [#allocation5], %s21
      %s23 = sshll.u32 [#allocation4], 4
      %s24 = int_to_ptr.vmem [resolvable:$true] %s23
      %29 = dma.hbm_to_vmem [thread:$0]  %s1, 3072, %s24, [#allocation5], 128, 128, 8
    $region9: #{forward.1} parent=1 // pred_fallthru
      _
    // Predicated region
    $region10: #{forward.1} parent=1 // pred_check
      _
    $region11: #{forward.1} parent=1 // pred_check_branch
      %31 = sbr.rel (0) target = $region13
    $region12: #{forward.1} parent=1 // pred_region
      _
    $region13: #{forward.1} parent=1 // pred_fallthru
      _
    // Predicated region
    $region14: #{forward.1} parent=1 // pred_check
      _
    $region15: #{forward.1} parent=1 // pred_check_branch
      %33 = sbr.rel (0) target = $region17
    $region16: #{forward.1} parent=1 // pred_region
      _
    $region17: #{forward.1} parent=1 // pred_fallthru
      _
    // Predicated region
    $region18: #{forward.1} parent=1 // pred_check
      _
    $region19: #{forward.1} parent=1 // pred_check_branch
      %35 = sbr.rel (0) target = $region21
    $region20: #{forward.1} parent=1 // pred_region
      _
    $region21: #{forward.1} parent=1 // pred_fallthru
      _
    // Predicated region
    $region22: #{forward.1} parent=1 // pred_check
      _
    $region23: #{forward.1} parent=1 // pred_check_branch
      %37 = sbr.rel (0) target = $region25
    $region24: #{forward.1} parent=1 // pred_region
      _
    $region25: #{forward.1} parent=1 // pred_fallthru
      _
    // Predicated region
    $region26: #{forward.1} parent=1 // pred_check
      _
    $region27: #{forward.1} parent=1 // pred_check_branch
      %39 = sbr.rel (0) target = $region29
    $region28: #{forward.1} parent=1 // pred_region
      _
    $region29: #{forward.1} parent=1 // pred_fallthru
      _
    // Predicated region
    $region30: #{forward.1} parent=1 // pred_check
      _
    $region31: #{forward.1} parent=1 // pred_check_branch
      %41 = sbr.rel (0) target = $region33
    $region32: #{forward.1} parent=1 // pred_region
      %s43 = ssub.s32 2048, 2048
      %44 = vsyncadd [#allocation7], %s43
      %s45 = sshll.u32 [#allocation6], 4
      %s46 = int_to_ptr.vmem [resolvable:$true] %s45
      %51 = dma.hbm_to_vmem [thread:$0]  %s7, 2048, %s46, [#allocation7], 128, 128, 8
    $region33: #{forward.1} parent=1 // pred_fallthru
      _
    // Predicated region
    $region34: #{forward.1} parent=1 // pred_check
      _
    $region35: #{forward.1} parent=1 // pred_check_branch
      %53 = sbr.rel (0) target = $region37
    $region36: #{forward.1} parent=1 // pred_region
      _
    $region37: #{forward.1} parent=1 // pred_fallthru
      _
    // Predicated region
    $region38: #{forward.1} parent=1 // pred_check
      _
    $region39: #{forward.1} parent=1 // pred_check_branch
      %55 = sbr.rel (0) target = $region41
    $region40: #{forward.1} parent=1 // pred_region
      %56 = dma.done [#allocation5], 3072
    $region41: #{forward.1} parent=1 // pred_fallthru
      _
    // Predicated region
    $region42: #{forward.1} parent=1 // pred_check
      _
    $region43: #{forward.1} parent=1 // pred_check_branch
      %58 = sbr.rel (0) target = $region45
    $region44: #{forward.1} parent=1 // pred_region
      %59 = dma.done [#allocation7], 2048
    $region45: #{forward.1} parent=1 // pred_fallthru
      _
    %v60 = vld [vmem:[%s0] sm:$0xff]
    %v61 = vld [vmem:[%s0 + $0x8] sm:$0xff]
    %v62 = vld [vmem:[%s0 + $0x10] sm:$0xff]
    %v63 = vld [vmem:[%s0 + $0x18] sm:$0xff]
    %vm64 = vcmask 516096
    %65 = vst.msk [vmem:[#allocation2] sm:$0x1] %vm64, 0.0
    %66 = vst.msk [vmem:[#allocation2 + $0x18] sm:$0x1] %vm64, 0.0
    %67 = vst.msk [vmem:[#allocation2 + $0x11] sm:$0x1] %vm64, 0.0
    %68 = vst.msk [vmem:[#allocation2 + $0x29] sm:$0x1] %vm64, 0.0
    %vm69 = vcmask 523264
    %70 = vst.msk [vmem:[#allocation2 + $0x1] sm:$0xff] %vm69, %v60
    %71 = vst.msk [vmem:[#allocation2 + $0x9] sm:$0xff] %vm69, %v61
    %72 = vst.msk [vmem:[#allocation2 + $0x19] sm:$0xff] %vm69, %v62
    %73 = vst.msk [vmem:[#allocation2 + $0x21] sm:$0xff] %vm69, %v63
    %v74 = vld [vmem:[#allocation2] sm:$0xff]
    %v75 = vld [vmem:[#allocation2 + $0x8] sm:$0xff]
    %v76 = vld [vmem:[#allocation2 + $0x18] sm:$0xff]
    %v77 = vld [vmem:[#allocation2 + $0x20] sm:$0xff]
    %v78 = vld [vmem:[#allocation4] sm:$0xff]
    %v79 = vld [vmem:[#allocation4 + $0x8] sm:$0xff]
    %v80 = vld [vmem:[#allocation4 + $0x10] sm:$0xff]
    %v81 = vld [vmem:[#allocation4 + $0x18] sm:$0xff]
    %v82 = vld [vmem:[#allocation4 + $0x20] sm:$0xff]
    %v83 = vld [vmem:[#allocation4 + $0x28] sm:$0xff]
    %v84 = vld [vmem:[#allocation4 + $0x30] sm:$0xff]
    %v85 = vld [vmem:[#allocation4 + $0x38] sm:$0xff]
    %v86 = vld [vmem:[#allocation2 + $0x1] sm:$0xff]
    %v87 = vld [vmem:[#allocation2 + $0x9] sm:$0xff]
    %v88 = vld [vmem:[#allocation2 + $0x19] sm:$0xff]
    %v89 = vld [vmem:[#allocation2 + $0x21] sm:$0xff]
    %s90 = scalar_lea.vmem [#allocation4], 64
    %v91 = vld [vmem:[%s90] sm:$0xff]
    %v92 = vld [vmem:[%s90 + $0x8] sm:$0xff]
    %v93 = vld [vmem:[%s90 + $0x10] sm:$0xff]
    %v94 = vld [vmem:[%s90 + $0x18] sm:$0xff]
    %v95 = vld [vmem:[%s90 + $0x20] sm:$0xff]
    %v96 = vld [vmem:[%s90 + $0x28] sm:$0xff]
    %v97 = vld [vmem:[%s90 + $0x30] sm:$0xff]
    %v98 = vld [vmem:[%s90 + $0x38] sm:$0xff]
    %v100 = vsel %vm69, %v86, 0
    %v103 = vsel %vm69, %v87, 0
    %v106 = vsel %vm69, %v88, 0
    %v109 = vsel %vm69, %v89, 0
    %111 = vmatprep.subr.mxu0 0.0
    %112 = vmatpush1.msra.mxu0 %v91
    %113 = vmatprep.subr.mxu0 0.0
    %114 = vmatpush1.msra.mxu0 %v92
    %115 = vmatprep.subr.mxu0 0.0
    %116 = vmatpush1.msra.mxu0 %v93
    %117 = vmatprep.subr.mxu0 0.0
    %118 = vmatpush1.msra.mxu0 %v94
    %119 = vmatprep.subr.mxu0 0.0
    %120 = vmatpush1.msra.mxu0 %v95
    %121 = vmatprep.subr.mxu0 0.0
    %122 = vmatpush1.msra.mxu0 %v96
    %123 = vmatprep.subr.mxu0 0.0
    %124 = vmatpush1.msra.mxu0 %v97
    %125 = vmatprep.subr.mxu0 0.0
    %126 = vmatpush1.msra.mxu0 %v98
    %127 = vmatprep.subr.mxu0 0.0
    %128 = vmatpush1.msra.mxu0 0.0
    %129 = vmatprep.subr.mxu0 0.0
    %130 = vmatpush1.msra.mxu0 0.0
    %131 = vmatprep.subr.mxu0 0.0
    %132 = vmatpush1.msra.mxu0 0.0
    %133 = vmatprep.subr.mxu0 0.0
    %134 = vmatpush1.msra.mxu0 0.0
    %135 = vmatprep.subr.mxu0 0.0
    %136 = vmatpush1.msra.mxu0 0.0
    %137 = vmatprep.subr.mxu0 0.0
    %138 = vmatpush1.msra.mxu0 0.0
    %139 = vmatprep.subr.mxu0 0.0
    %140 = vmatpush1.msra.mxu0 0.0
    %141 = vmatprep.subr.mxu0 0.0
    %142 = vmatpush1.msra.mxu0 0.0
    %143 = vmatprep.subr.mxu0 0.0
    %144 = vmatpush1.msra.mxu0 0.0
    %145 = vmatprep.subr.mxu0 0.0
    %146 = vmatpush1.msra.mxu0 0.0
    %147 = vmatprep.subr.mxu0 0.0
    %148 = vmatpush1.msra.mxu0 0.0
    %149 = vmatprep.subr.mxu0 0.0
    %150 = vmatpush1.msra.mxu0 0.0
    %151 = vmatprep.subr.mxu0 0.0
    %152 = vmatpush1.msra.mxu0 0.0
    %153 = vmatprep.subr.mxu0 0.0
    %154 = vmatpush1.msra.mxu0 0.0
    %155 = vmatprep.subr.mxu0 0.0
    %156 = vmatpush1.msra.mxu0 0.0
    %157 = vmatprep.subr.mxu0 0.0
    %158 = vmatpush1.msra.mxu0 0.0
    %159 = vmatprep.subr.mxu0 0.0
    %160 = vmatpush1.msra.mxu0 0.0
    %161 = vmatprep.subr.mxu0 0.0
    %162 = vmatpush1.msra.mxu0 0.0
    %163 = vmatprep.subr.mxu0 0.0
    %164 = vmatpush1.msra.mxu0 0.0
    %165 = vmatprep.subr.mxu0 0.0
    %166 = vmatpush1.msra.mxu0 0.0
    %167 = vmatprep.subr.mxu0 0.0
    %168 = vmatpush1.msra.mxu0 0.0
    %169 = vmatprep.subr.mxu0 0.0
    %170 = vmatpush1.msra.mxu0 0.0
    %171 = vmatprep.subr.mxu0 0.0
    %172 = vmatpush1.msra.mxu0 0.0
    %173 = vmatprep.subr.mxu0 0.0
    %174 = vmatpush1.msra.mxu0 0.0
    %175 = vmatprep.mubr.f32.mxu0 0.0
    %176 = vmatmul.mubr.f32.gmra.mrb[0].mxu0 %v100
    %v177 = vpop.f32.mrb[0].mxu0
    %v178 = vadd.f32 0.0, %v177
    %v179 = vpop.f32.mrb[0].mxu0
    %180 = vmatprep.mubr.f32.mxu0 0.0
    %181 = vmatmul.mubr.f32.gmra.mrb[0].mxu0 %v103
    %v182 = vpop.f32.mrb[0].mxu0
    %v183 = vadd.f32 0.0, %v182
    %v184 = vpop.f32.mrb[0].mxu0
    %185 = vmatprep.mubr.f32.mxu0 0.0
    %186 = vmatmul.mubr.f32.gmra.mrb[0].mxu0 %v106
    %v187 = vpop.f32.mrb[0].mxu0
    %v188 = vadd.f32 0.0, %v187
    %v189 = vpop.f32.mrb[0].mxu0
    %190 = vmatprep.mubr.f32.mxu0 0.0
    %191 = vmatmul.mubr.f32.gmra.mrb[0].mxu0 %v109
    %v192 = vpop.f32.mrb[0].mxu0
    %v193 = vadd.f32 0.0, %v192
    %v194 = vpop.f32.mrb[0].mxu0
    %195 = vdwg.mxu0
    %v197 = vsel %vm69, %v74, 0
    %v200 = vsel %vm69, %v75, 0
    %v203 = vsel %vm69, %v76, 0
    %v206 = vsel %vm69, %v77, 0
    %208 = vmatprep.subr.mxu0 0.0
    %209 = vmatpush1.msra.mxu0 %v78
    %210 = vmatprep.subr.mxu0 0.0
    %211 = vmatpush1.msra.mxu0 %v79
    %212 = vmatprep.subr.mxu0 0.0
    %213 = vmatpush1.msra.mxu0 %v80
    %214 = vmatprep.subr.mxu0 0.0
    %215 = vmatpush1.msra.mxu0 %v81
    %216 = vmatprep.subr.mxu0 0.0
    %217 = vmatpush1.msra.mxu0 %v82
    %218 = vmatprep.subr.mxu0 0.0
    %219 = vmatpush1.msra.mxu0 %v83
    %220 = vmatprep.subr.mxu0 0.0
    %221 = vmatpush1.msra.mxu0 %v84
    %222 = vmatprep.subr.mxu0 0.0
    %223 = vmatpush1.msra.mxu0 %v85
    %224 = vmatprep.subr.mxu0 0.0
    %225 = vmatpush1.msra.mxu0 0.0
    %226 = vmatprep.subr.mxu0 0.0
    %227 = vmatpush1.msra.mxu0 0.0
    %228 = vmatprep.subr.mxu0 0.0
    %229 = vmatpush1.msra.mxu0 0.0
    %230 = vmatprep.subr.mxu0 0.0
    %231 = vmatpush1.msra.mxu0 0.0
    %232 = vmatprep.subr.mxu0 0.0
    %233 = vmatpush1.msra.mxu0 0.0
    %234 = vmatprep.subr.mxu0 0.0
    %235 = vmatpush1.msra.mxu0 0.0
    %236 = vmatprep.subr.mxu0 0.0
    %237 = vmatpush1.msra.mxu0 0.0
    %238 = vmatprep.subr.mxu0 0.0
    %239 = vmatpush1.msra.mxu0 0.0
    %240 = vmatprep.subr.mxu0 0.0
    %241 = vmatpush1.msra.mxu0 0.0
    %242 = vmatprep.subr.mxu0 0.0
    %243 = vmatpush1.msra.mxu0 0.0
    %244 = vmatprep.subr.mxu0 0.0
    %245 = vmatpush1.msra.mxu0 0.0
    %246 = vmatprep.subr.mxu0 0.0
    %247 = vmatpush1.msra.mxu0 0.0
    %248 = vmatprep.subr.mxu0 0.0
    %249 = vmatpush1.msra.mxu0 0.0
    %250 = vmatprep.subr.mxu0 0.0
    %251 = vmatpush1.msra.mxu0 0.0
    %252 = vmatprep.subr.mxu0 0.0
    %253 = vmatpush1.msra.mxu0 0.0
    %254 = vmatprep.subr.mxu0 0.0
    %255 = vmatpush1.msra.mxu0 0.0
    %256 = vmatprep.subr.mxu0 0.0
    %257 = vmatpush1.msra.mxu0 0.0
    %258 = vmatprep.subr.mxu0 0.0
    %259 = vmatpush1.msra.mxu0 0.0
    %260 = vmatprep.subr.mxu0 0.0
    %261 = vmatpush1.msra.mxu0 0.0
    %262 = vmatprep.subr.mxu0 0.0
    %263 = vmatpush1.msra.mxu0 0.0
    %264 = vmatprep.subr.mxu0 0.0
    %265 = vmatpush1.msra.mxu0 0.0
    %266 = vmatprep.subr.mxu0 0.0
    %267 = vmatpush1.msra.mxu0 0.0
    %268 = vmatprep.subr.mxu0 0.0
    %269 = vmatpush1.msra.mxu0 0.0
    %270 = vmatprep.subr.mxu0 0.0
    %271 = vmatpush1.msra.mxu0 0.0
    %272 = vmatprep.mubr.f32.mxu0 0.0
    %273 = vmatmul.mubr.f32.gmra.mrb[0].mxu0 %v197
    %v274 = vpop.f32.mrb[0].mxu0
    %v275 = vadd.f32 %v178, %v274
    %v276 = vpop.f32.mrb[0].mxu0
    %277 = vmatprep.mubr.f32.mxu0 0.0
    %278 = vmatmul.mubr.f32.gmra.mrb[0].mxu0 %v200
    %v279 = vpop.f32.mrb[0].mxu0
    %v280 = vadd.f32 %v183, %v279
    %v281 = vpop.f32.mrb[0].mxu0
    %282 = vmatprep.mubr.f32.mxu0 0.0
    %283 = vmatmul.mubr.f32.gmra.mrb[0].mxu0 %v203
    %v284 = vpop.f32.mrb[0].mxu0
    %v285 = vadd.f32 %v188, %v284
    %v286 = vpop.f32.mrb[0].mxu0
    %287 = vmatprep.mubr.f32.mxu0 0.0
    %288 = vmatmul.mubr.f32.gmra.mrb[0].mxu0 %v206
    %v289 = vpop.f32.mrb[0].mxu0
    %v290 = vadd.f32 %v193, %v289
    %v291 = vpop.f32.mrb[0].mxu0
    %292 = vdwg.mxu0
    %v293 = vld [vmem:[#allocation2 + $0x2] sm:$0xff]
    %v294 = vld [vmem:[#allocation2 + $0xa] sm:$0xff]
    %v295 = vld [vmem:[#allocation2 + $0x1a] sm:$0xff]
    %v296 = vld [vmem:[#allocation2 + $0x22] sm:$0xff]
    %s297 = scalar_lea.vmem [#allocation4], 128
    %v298 = vld [vmem:[%s297] sm:$0xff]
    %v299 = vld [vmem:[%s297 + $0x8] sm:$0xff]
    %v300 = vld [vmem:[%s297 + $0x10] sm:$0xff]
    %v301 = vld [vmem:[%s297 + $0x18] sm:$0xff]
    %v302 = vld [vmem:[%s297 + $0x20] sm:$0xff]
    %v303 = vld [vmem:[%s297 + $0x28] sm:$0xff]
    %v304 = vld [vmem:[%s297 + $0x30] sm:$0xff]
    %v305 = vld [vmem:[%s297 + $0x38] sm:$0xff]
    %v307 = vsel %vm69, %v293, 0
    %v310 = vsel %vm69, %v294, 0
    %v313 = vsel %vm69, %v295, 0
    %v316 = vsel %vm69, %v296, 0
    %318 = vmatprep.subr.mxu0 0.0
    %319 = vmatpush1.msra.mxu0 %v298
    %320 = vmatprep.subr.mxu0 0.0
    %321 = vmatpush1.msra.mxu0 %v299
    %322 = vmatprep.subr.mxu0 0.0
    %323 = vmatpush1.msra.mxu0 %v300
    %324 = vmatprep.subr.mxu0 0.0
    %325 = vmatpush1.msra.mxu0 %v301
    %326 = vmatprep.subr.mxu0 0.0
    %327 = vmatpush1.msra.mxu0 %v302
    %328 = vmatprep.subr.mxu0 0.0
    %329 = vmatpush1.msra.mxu0 %v303
    %330 = vmatprep.subr.mxu0 0.0
    %331 = vmatpush1.msra.mxu0 %v304
    %332 = vmatprep.subr.mxu0 0.0
    %333 = vmatpush1.msra.mxu0 %v305
    %334 = vmatprep.subr.mxu0 0.0
    %335 = vmatpush1.msra.mxu0 0.0
    %336 = vmatprep.subr.mxu0 0.0
    %337 = vmatpush1.msra.mxu0 0.0
    %338 = vmatprep.subr.mxu0 0.0
    %339 = vmatpush1.msra.mxu0 0.0
    %340 = vmatprep.subr.mxu0 0.0
    %341 = vmatpush1.msra.mxu0 0.0
    %342 = vmatprep.subr.mxu0 0.0
    %343 = vmatpush1.msra.mxu0 0.0
    %344 = vmatprep.subr.mxu0 0.0
    %345 = vmatpush1.msra.mxu0 0.0
    %346 = vmatprep.subr.mxu0 0.0
    %347 = vmatpush1.msra.mxu0 0.0
    %348 = vmatprep.subr.mxu0 0.0
    %349 = vmatpush1.msra.mxu0 0.0
    %350 = vmatprep.subr.mxu0 0.0
    %351 = vmatpush1.msra.mxu0 0.0
    %352 = vmatprep.subr.mxu0 0.0
    %353 = vmatpush1.msra.mxu0 0.0
    %354 = vmatprep.subr.mxu0 0.0
    %355 = vmatpush1.msra.mxu0 0.0
    %356 = vmatprep.subr.mxu0 0.0
    %357 = vmatpush1.msra.mxu0 0.0
    %358 = vmatprep.subr.mxu0 0.0
    %359 = vmatpush1.msra.mxu0 0.0
    %360 = vmatprep.subr.mxu0 0.0
    %361 = vmatpush1.msra.mxu0 0.0
    %362 = vmatprep.subr.mxu0 0.0
    %363 = vmatpush1.msra.mxu0 0.0
    %364 = vmatprep.subr.mxu0 0.0
    %365 = vmatpush1.msra.mxu0 0.0
    %366 = vmatprep.subr.mxu0 0.0
    %367 = vmatpush1.msra.mxu0 0.0
    %368 = vmatprep.subr.mxu0 0.0
    %369 = vmatpush1.msra.mxu0 0.0
    %370 = vmatprep.subr.mxu0 0.0
    %371 = vmatpush1.msra.mxu0 0.0
    %372 = vmatprep.subr.mxu0 0.0
    %373 = vmatpush1.msra.mxu0 0.0
    %374 = vmatprep.subr.mxu0 0.0
    %375 = vmatpush1.msra.mxu0 0.0
    %376 = vmatprep.subr.mxu0 0.0
    %377 = vmatpush1.msra.mxu0 0.0
    %378 = vmatprep.subr.mxu0 0.0
    %379 = vmatpush1.msra.mxu0 0.0
    %380 = vmatprep.subr.mxu0 0.0
    %381 = vmatpush1.msra.mxu0 0.0
    %382 = vmatprep.mubr.f32.mxu0 0.0
    %383 = vmatmul.mubr.f32.gmra.mrb[0].mxu0 %v307
    %v384 = vpop.f32.mrb[0].mxu0
    %v385 = vadd.f32 0.0, %v384
    %v386 = vpop.f32.mrb[0].mxu0
    %387 = vmatprep.mubr.f32.mxu0 0.0
    %388 = vmatmul.mubr.f32.gmra.mrb[0].mxu0 %v310
    %v389 = vpop.f32.mrb[0].mxu0
    %v390 = vadd.f32 0.0, %v389
    %v391 = vpop.f32.mrb[0].mxu0
    %392 = vmatprep.mubr.f32.mxu0 0.0
    %393 = vmatmul.mubr.f32.gmra.mrb[0].mxu0 %v313
    %v394 = vpop.f32.mrb[0].mxu0
    %v395 = vadd.f32 0.0, %v394
    %v396 = vpop.f32.mrb[0].mxu0
    %397 = vmatprep.mubr.f32.mxu0 0.0
    %398 = vmatmul.mubr.f32.gmra.mrb[0].mxu0 %v316
    %v399 = vpop.f32.mrb[0].mxu0
    %v400 = vadd.f32 0.0, %v399
    %v401 = vpop.f32.mrb[0].mxu0
    %402 = vdwg.mxu0
    %v403 = vadd.f32 %v275, %v385
    %v404 = vadd.f32 %v280, %v390
    %v405 = vadd.f32 %v285, %v395
    %v406 = vadd.f32 %v290, %v400
    %v407 = vadd.f32 %v403, %v404
    %v408 = vadd.f32 %v407, %v405
    %v409 = vadd.f32 %v408, %v406
    %v410 = vrot.slane %v409, 4
    %v411 = vadd.f32 %v409, %v410
    %v412 = vrot.slane %v411, 2
    %v413 = vadd.f32 %v411, %v412
    %v414 = vrot.slane %v413, 1
    %v415 = vadd.f32 %v413, %v414
    %v416 = vmul.f32 %v403, %v403
    %v417 = vmul.f32 %v404, %v404
    %v418 = vmul.f32 %v405, %v405
    %v419 = vmul.f32 %v406, %v406
    %v420 = vadd.f32 %v416, %v417
    %v421 = vadd.f32 %v420, %v418
    %v422 = vadd.f32 %v421, %v419
    %v423 = vrot.slane %v422, 4
    %v424 = vadd.f32 %v422, %v423
    %v425 = vrot.slane %v424, 2
    %v426 = vadd.f32 %v424, %v425
    %v427 = vrot.slane %v426, 1
    %v428 = vadd.f32 %v426, %v427
    %v429 = vld [vmem:[#allocation6] sm:$0xff]
    %v430 = vld [vmem:[#allocation6 + $0x8] sm:$0xff]
    %v431 = vld [vmem:[#allocation6 + $0x10] sm:$0xff]
    %v432 = vld [vmem:[#allocation6 + $0x18] sm:$0xff]
    %v433 = vld [vmem:[#allocation6 + $0x20] sm:$0xff]
    %v434 = vld [vmem:[#allocation6 + $0x28] sm:$0xff]
    %v435 = vld [vmem:[#allocation6 + $0x30] sm:$0xff]
    %v436 = vld [vmem:[#allocation6 + $0x38] sm:$0xff]
    %v437 = vld [vmem:[#allocation6 + $0x40] sm:$0xff]
    %v438 = vld [vmem:[#allocation6 + $0x48] sm:$0xff]
    %v439 = vld [vmem:[#allocation6 + $0x50] sm:$0xff]
    %v440 = vld [vmem:[#allocation6 + $0x58] sm:$0xff]
    %v441 = vld [vmem:[#allocation6 + $0x60] sm:$0xff]
    %v442 = vld [vmem:[#allocation6 + $0x68] sm:$0xff]
    %v443 = vld [vmem:[#allocation6 + $0x70] sm:$0xff]
    %v444 = vld [vmem:[#allocation6 + $0x78] sm:$0xff]
    %445 = vmatprep.subr.mxu0 0.0
    %446 = vmatpush1.msra.mxu0 %v429
    %447 = vmatprep.subr.mxu0 0.0
    %448 = vmatpush1.msra.mxu0 %v430
    %449 = vmatprep.subr.mxu0 0.0
    %450 = vmatpush1.msra.mxu0 %v431
    %451 = vmatprep.subr.mxu0 0.0
    %452 = vmatpush1.msra.mxu0 %v432
    %453 = vmatprep.subr.mxu0 0.0
    %454 = vmatpush1.msra.mxu0 %v433
    %455 = vmatprep.subr.mxu0 0.0
    %456 = vmatpush1.msra.mxu0 %v434
    %457 = vmatprep.subr.mxu0 0.0
    %458 = vmatpush1.msra.mxu0 %v435
    %459 = vmatprep.subr.mxu0 0.0
    %460 = vmatpush1.msra.mxu0 %v436
    %461 = vmatprep.subr.mxu0 0.0
    %462 = vmatpush1.msra.mxu0 %v437
    %463 = vmatprep.subr.mxu0 0.0
    %464 = vmatpush1.msra.mxu0 %v438
    %465 = vmatprep.subr.mxu0 0.0
    %466 = vmatpush1.msra.mxu0 %v439
    %467 = vmatprep.subr.mxu0 0.0
    %468 = vmatpush1.msra.mxu0 %v440
    %469 = vmatprep.subr.mxu0 0.0
    %470 = vmatpush1.msra.mxu0 %v441
    %471 = vmatprep.subr.mxu0 0.0
    %472 = vmatpush1.msra.mxu0 %v442
    %473 = vmatprep.subr.mxu0 0.0
    %474 = vmatpush1.msra.mxu0 %v443
    %475 = vmatprep.subr.mxu0 0.0
    %476 = vmatpush1.msra.mxu0 %v444
    %477 = vmatprep.subr.mxu0 0.0
    %478 = vmatpush1.msra.mxu0 0.0
    %479 = vmatprep.subr.mxu0 0.0
    %480 = vmatpush1.msra.mxu0 0.0
    %481 = vmatprep.subr.mxu0 0.0
    %482 = vmatpush1.msra.mxu0 0.0
    %483 = vmatprep.subr.mxu0 0.0
    %484 = vmatpush1.msra.mxu0 0.0
    %485 = vmatprep.subr.mxu0 0.0
    %486 = vmatpush1.msra.mxu0 0.0
    %487 = vmatprep.subr.mxu0 0.0
    %488 = vmatpush1.msra.mxu0 0.0
    %489 = vmatprep.subr.mxu0 0.0
    %490 = vmatpush1.msra.mxu0 0.0
    %491 = vmatprep.subr.mxu0 0.0
    %492 = vmatpush1.msra.mxu0 0.0
    %493 = vmatprep.subr.mxu0 0.0
    %494 = vmatpush1.msra.mxu0 0.0
    %495 = vmatprep.subr.mxu0 0.0
    %496 = vmatpush1.msra.mxu0 0.0
    %497 = vmatprep.subr.mxu0 0.0
    %498 = vmatpush1.msra.mxu0 0.0
    %499 = vmatprep.subr.mxu0 0.0
    %500 = vmatpush1.msra.mxu0 0.0
    %501 = vmatprep.subr.mxu0 0.0
    %502 = vmatpush1.msra.mxu0 0.0
    %503 = vmatprep.subr.mxu0 0.0
    %504 = vmatpush1.msra.mxu0 0.0
    %505 = vmatprep.subr.mxu0 0.0
    %506 = vmatpush1.msra.mxu0 0.0
    %507 = vmatprep.subr.mxu0 0.0
    %508 = vmatpush1.msra.mxu0 0.0
    %509 = vmatprep.mubr.f32.mxu0 0.0
    %510 = vmatmul.mubr.f32.gmra.mrb[0].mxu0 %v415
    %v511 = vpop.f32.mrb[0].mxu0
    %v512 = vadd.f32 0.0, %v511
    %v513 = vpop.f32.mrb[0].mxu0
    %514 = vdwg.mxu0
    %515 = vmatprep.subr.mxu0 0.0
    %516 = vmatpush1.msra.mxu0 %v429
    %517 = vmatprep.subr.mxu0 0.0
    %518 = vmatpush1.msra.mxu0 %v430
    %519 = vmatprep.subr.mxu0 0.0
    %520 = vmatpush1.msra.mxu0 %v431
    %521 = vmatprep.subr.mxu0 0.0
    %522 = vmatpush1.msra.mxu0 %v432
    %523 = vmatprep.subr.mxu0 0.0
    %524 = vmatpush1.msra.mxu0 %v433
    %525 = vmatprep.subr.mxu0 0.0
    %526 = vmatpush1.msra.mxu0 %v434
    %527 = vmatprep.subr.mxu0 0.0
    %528 = vmatpush1.msra.mxu0 %v435
    %529 = vmatprep.subr.mxu0 0.0
    %530 = vmatpush1.msra.mxu0 %v436
    %531 = vmatprep.subr.mxu0 0.0
    %532 = vmatpush1.msra.mxu0 %v437
    %533 = vmatprep.subr.mxu0 0.0
    %534 = vmatpush1.msra.mxu0 %v438
    %535 = vmatprep.subr.mxu0 0.0
    %536 = vmatpush1.msra.mxu0 %v439
    %537 = vmatprep.subr.mxu0 0.0
    %538 = vmatpush1.msra.mxu0 %v440
    %539 = vmatprep.subr.mxu0 0.0
    %540 = vmatpush1.msra.mxu0 %v441
    %541 = vmatprep.subr.mxu0 0.0
    %542 = vmatpush1.msra.mxu0 %v442
    %543 = vmatprep.subr.mxu0 0.0
    %544 = vmatpush1.msra.mxu0 %v443
    %545 = vmatprep.subr.mxu0 0.0
    %546 = vmatpush1.msra.mxu0 %v444
    %547 = vmatprep.subr.mxu0 0.0
    %548 = vmatpush1.msra.mxu0 0.0
    %549 = vmatprep.subr.mxu0 0.0
    %550 = vmatpush1.msra.mxu0 0.0
    %551 = vmatprep.subr.mxu0 0.0
    %552 = vmatpush1.msra.mxu0 0.0
    %553 = vmatprep.subr.mxu0 0.0
    %554 = vmatpush1.msra.mxu0 0.0
    %555 = vmatprep.subr.mxu0 0.0
    %556 = vmatpush1.msra.mxu0 0.0
    %557 = vmatprep.subr.mxu0 0.0
    %558 = vmatpush1.msra.mxu0 0.0
    %559 = vmatprep.subr.mxu0 0.0
    %560 = vmatpush1.msra.mxu0 0.0
    %561 = vmatprep.subr.mxu0 0.0
    %562 = vmatpush1.msra.mxu0 0.0
    %563 = vmatprep.subr.mxu0 0.0
    %564 = vmatpush1.msra.mxu0 0.0
    %565 = vmatprep.subr.mxu0 0.0
    %566 = vmatpush1.msra.mxu0 0.0
    %567 = vmatprep.subr.mxu0 0.0
    %568 = vmatpush1.msra.mxu0 0.0
    %569 = vmatprep.subr.mxu0 0.0
    %570 = vmatpush1.msra.mxu0 0.0
    %571 = vmatprep.subr.mxu0 0.0
    %572 = vmatpush1.msra.mxu0 0.0
    %573 = vmatprep.subr.mxu0 0.0
    %574 = vmatpush1.msra.mxu0 0.0
    %575 = vmatprep.subr.mxu0 0.0
    %576 = vmatpush1.msra.mxu0 0.0
    %577 = vmatprep.subr.mxu0 0.0
    %578 = vmatpush1.msra.mxu0 0.0
    %579 = vmatprep.mubr.f32.mxu0 0.0
    %580 = vmatmul.mubr.f32.gmra.mrb[0].mxu0 %v428
    %v581 = vpop.f32.mrb[0].mxu0
    %v582 = vadd.f32 0.0, %v581
    %v583 = vpop.f32.mrb[0].mxu0
    %584 = vdwg.mxu0
    %v585 = vmul.f32 %v512, 0.001953125
    %v586 = vmul.f32 %v582, 0.001953125
    %v587 = vmul.f32 %v585, %v585
    %v588 = vsub.f32 %v586, %v587
    %v589 = vadd.f32 %v588, 1e-05
    %v590 = vrsqrt.pop %v589
    %v591 = vld [vmem:[%s2] sm:$0x1]
    %v592 = vmul.f32 %v590, %v591
    %v593 = vld [vmem:[%s3] sm:$0x1]
    %v594 = vmul.f32 %v585, %v592
    %v595 = vsub.f32 %v593, %v594
    %v596 = vld [vmem:[%s8] sm:$0xff]
    %vm597 = vcmask 64512
    %v599 = vsel %vm597, %v592, 0
    %601 = vmatprep.subr.mxu0 0.0
    %602 = vmatpush1.msra.mxu0 %v596
    %603 = vmatprep.subr.mxu0 0.0
    %604 = vmatpush1.msra.mxu0 0.0
    %605 = vmatprep.subr.mxu0 0.0
    %606 = vmatpush1.msra.mxu0 0.0
    %607 = vmatprep.subr.mxu0 0.0
    %608 = vmatpush1.msra.mxu0 0.0
    %609 = vmatprep.subr.mxu0 0.0
    %610 = vmatpush1.msra.mxu0 0.0
    %611 = vmatprep.subr.mxu0 0.0
    %612 = vmatpush1.msra.mxu0 0.0
    %613 = vmatprep.subr.mxu0 0.0
    %614 = vmatpush1.msra.mxu0 0.0
    %615 = vmatprep.subr.mxu0 0.0
    %616 = vmatpush1.msra.mxu0 0.0
    %617 = vmatprep.subr.mxu0 0.0
    %618 = vmatpush1.msra.mxu0 0.0
    %619 = vmatprep.subr.mxu0 0.0
    %620 = vmatpush1.msra.mxu0 0.0
    %621 = vmatprep.subr.mxu0 0.0
    %622 = vmatpush1.msra.mxu0 0.0
    %623 = vmatprep.subr.mxu0 0.0
    %624 = vmatpush1.msra.mxu0 0.0
    %625 = vmatprep.subr.mxu0 0.0
    %626 = vmatpush1.msra.mxu0 0.0
    %627 = vmatprep.subr.mxu0 0.0
    %628 = vmatpush1.msra.mxu0 0.0
    %629 = vmatprep.subr.mxu0 0.0
    %630 = vmatpush1.msra.mxu0 0.0
    %631 = vmatprep.subr.mxu0 0.0
    %632 = vmatpush1.msra.mxu0 0.0
    %633 = vmatprep.subr.mxu0 0.0
    %634 = vmatpush1.msra.mxu0 0.0
    %635 = vmatprep.subr.mxu0 0.0
    %636 = vmatpush1.msra.mxu0 0.0
    %637 = vmatprep.subr.mxu0 0.0
    %638 = vmatpush1.msra.mxu0 0.0
    %639 = vmatprep.subr.mxu0 0.0
    %640 = vmatpush1.msra.mxu0 0.0
    %641 = vmatprep.subr.mxu0 0.0
    %642 = vmatpush1.msra.mxu0 0.0
    %643 = vmatprep.subr.mxu0 0.0
    %644 = vmatpush1.msra.mxu0 0.0
    %645 = vmatprep.subr.mxu0 0.0
    %646 = vmatpush1.msra.mxu0 0.0
    %647 = vmatprep.subr.mxu0 0.0
    %648 = vmatpush1.msra.mxu0 0.0
    %649 = vmatprep.subr.mxu0 0.0
    %650 = vmatpush1.msra.mxu0 0.0
    %651 = vmatprep.subr.mxu0 0.0
    %652 = vmatpush1.msra.mxu0 0.0
    %653 = vmatprep.subr.mxu0 0.0
    %654 = vmatpush1.msra.mxu0 0.0
    %655 = vmatprep.subr.mxu0 0.0
    %656 = vmatpush1.msra.mxu0 0.0
    %657 = vmatprep.subr.mxu0 0.0
    %658 = vmatpush1.msra.mxu0 0.0
    %659 = vmatprep.subr.mxu0 0.0
    %660 = vmatpush1.msra.mxu0 0.0
    %661 = vmatprep.subr.mxu0 0.0
    %662 = vmatpush1.msra.mxu0 0.0
    %663 = vmatprep.subr.mxu0 0.0
    %664 = vmatpush1.msra.mxu0 0.0
    %665 = vmatprep.mubr.f32.mxu0 0.0
    %666 = vmatmul.mubr.f32.gmra.mrb[0].mxu0 %v599
    %v667 = vpop.f32.mrb[0].mxu0
    %v668 = vadd.f32 0.0, %v667
    %v669 = vpop.f32.mrb[0].mxu0
    %670 = vdwg.mxu0
    %v672 = vsel %vm597, %v595, 0
    %674 = vmatprep.subr.mxu0 0.0
    %675 = vmatpush1.msra.mxu0 %v596
    %676 = vmatprep.subr.mxu0 0.0
    %677 = vmatpush1.msra.mxu0 0.0
    %678 = vmatprep.subr.mxu0 0.0
    %679 = vmatpush1.msra.mxu0 0.0
    %680 = vmatprep.subr.mxu0 0.0
    %681 = vmatpush1.msra.mxu0 0.0
    %682 = vmatprep.subr.mxu0 0.0
    %683 = vmatpush1.msra.mxu0 0.0
    %684 = vmatprep.subr.mxu0 0.0
    %685 = vmatpush1.msra.mxu0 0.0
    %686 = vmatprep.subr.mxu0 0.0
    %687 = vmatpush1.msra.mxu0 0.0
    %688 = vmatprep.subr.mxu0 0.0
    %689 = vmatpush1.msra.mxu0 0.0
    %690 = vmatprep.subr.mxu0 0.0
    %691 = vmatpush1.msra.mxu0 0.0
    %692 = vmatprep.subr.mxu0 0.0
    %693 = vmatpush1.msra.mxu0 0.0
    %694 = vmatprep.subr.mxu0 0.0
    %695 = vmatpush1.msra.mxu0 0.0
    %696 = vmatprep.subr.mxu0 0.0
    %697 = vmatpush1.msra.mxu0 0.0
    %698 = vmatprep.subr.mxu0 0.0
    %699 = vmatpush1.msra.mxu0 0.0
    %700 = vmatprep.subr.mxu0 0.0
    %701 = vmatpush1.msra.mxu0 0.0
    %702 = vmatprep.subr.mxu0 0.0
    %703 = vmatpush1.msra.mxu0 0.0
    %704 = vmatprep.subr.mxu0 0.0
    %705 = vmatpush1.msra.mxu0 0.0
    %706 = vmatprep.subr.mxu0 0.0
    %707 = vmatpush1.msra.mxu0 0.0
    %708 = vmatprep.subr.mxu0 0.0
    %709 = vmatpush1.msra.mxu0 0.0
    %710 = vmatprep.subr.mxu0 0.0
    %711 = vmatpush1.msra.mxu0 0.0
    %712 = vmatprep.subr.mxu0 0.0
    %713 = vmatpush1.msra.mxu0 0.0
    %714 = vmatprep.subr.mxu0 0.0
    %715 = vmatpush1.msra.mxu0 0.0
    %716 = vmatprep.subr.mxu0 0.0
    %717 = vmatpush1.msra.mxu0 0.0
    %718 = vmatprep.subr.mxu0 0.0
    %719 = vmatpush1.msra.mxu0 0.0
    %720 = vmatprep.subr.mxu0 0.0
    %721 = vmatpush1.msra.mxu0 0.0
    %722 = vmatprep.subr.mxu0 0.0
    %723 = vmatpush1.msra.mxu0 0.0
    %724 = vmatprep.subr.mxu0 0.0
    %725 = vmatpush1.msra.mxu0 0.0
    %726 = vmatprep.subr.mxu0 0.0
    %727 = vmatpush1.msra.mxu0 0.0
    %728 = vmatprep.subr.mxu0 0.0
    %729 = vmatpush1.msra.mxu0 0.0
    %730 = vmatprep.subr.mxu0 0.0
    %731 = vmatpush1.msra.mxu0 0.0
    %732 = vmatprep.subr.mxu0 0.0
    %733 = vmatpush1.msra.mxu0 0.0
    %734 = vmatprep.subr.mxu0 0.0
    %735 = vmatpush1.msra.mxu0 0.0
    %736 = vmatprep.subr.mxu0 0.0
    %737 = vmatpush1.msra.mxu0 0.0
    %738 = vmatprep.mubr.f32.mxu0 0.0
    %739 = vmatmul.mubr.f32.gmra.mrb[0].mxu0 %v672
    %v740 = vpop.f32.mrb[0].mxu0
    %v741 = vadd.f32 0.0, %v740
    %v742 = vpop.f32.mrb[0].mxu0
    %743 = vdwg.mxu0
    %v744 = vlaneseq
    %v745 = vshrl.u32 %v744, 7
    %v746 = vsub.s32 0, %v745
    %v747 = vrot.slane %v668, %v746
    %v748 = vmul.f32 %v403, %v747
    %v749 = vmul.f32 %v404, %v747
    %v750 = vmul.f32 %v405, %v747
    %v751 = vmul.f32 %v406, %v747
    %v752 = vlaneseq
    %v753 = vshrl.u32 %v752, 7
    %v754 = vsub.s32 0, %v753
    %v755 = vrot.slane %v741, %v754
    %v756 = vadd.f32 %v748, %v755
    %v757 = vadd.f32 %v749, %v755
    %v758 = vadd.f32 %v750, %v755
    %v759 = vadd.f32 %v751, %v755
    %v760 = vmax.f32 %v756, 0.0
    %v761 = vmax.f32 %v757, 0.0
    %v762 = vmax.f32 %v758, 0.0
    %v763 = vmax.f32 %v759, 0.0
    %764 = vst [vmem:[#allocation3] sm:$0x1] 0.0
    %765 = vst [vmem:[#allocation3 + $0x18] sm:$0x1] 0.0
    %766 = vst [vmem:[#allocation3 + $0x11] sm:$0x1] 0.0
    %767 = vst [vmem:[#allocation3 + $0x29] sm:$0x1] 0.0
    %768 = vst [vmem:[#allocation3 + $0x1] sm:$0xff] %v760
    %769 = vst [vmem:[#allocation3 + $0x9] sm:$0xff] %v761
    %770 = vst [vmem:[#allocation3 + $0x19] sm:$0xff] %v762
    %771 = vst [vmem:[#allocation3 + $0x21] sm:$0xff] %v763
    %v772 = vld [vmem:[#allocation3] sm:$0xff]
    %v773 = vld [vmem:[#allocation3 + $0x8] sm:$0xff]
    %v774 = vld [vmem:[#allocation3 + $0x18] sm:$0xff]
    %v775 = vld [vmem:[#allocation3 + $0x20] sm:$0xff]
    %v776 = vld [vmem:[%s4] sm:$0xff]
    %v777 = vld [vmem:[%s4 + $0x8] sm:$0xff]
    %v778 = vld [vmem:[%s4 + $0x10] sm:$0xff]
    %v779 = vld [vmem:[%s4 + $0x18] sm:$0xff]
    %v780 = vld [vmem:[%s4 + $0x20] sm:$0xff]
    %v781 = vld [vmem:[%s4 + $0x28] sm:$0xff]
    %v782 = vld [vmem:[%s4 + $0x30] sm:$0xff]
    %v783 = vld [vmem:[%s4 + $0x38] sm:$0xff]
    %v784 = vld [vmem:[%s4 + $0x40] sm:$0xff]
    %v785 = vld [vmem:[%s4 + $0x48] sm:$0xff]
    %v786 = vld [vmem:[%s4 + $0x50] sm:$0xff]
    %v787 = vld [vmem:[%s4 + $0x58] sm:$0xff]
    %v788 = vld [vmem:[%s4 + $0x60] sm:$0xff]
    %v789 = vld [vmem:[%s4 + $0x68] sm:$0xff]
    %v790 = vld [vmem:[%s4 + $0x70] sm:$0xff]
    %v791 = vld [vmem:[%s4 + $0x78] sm:$0xff]
    %v792 = vld [vmem:[#allocation3 + $0x1] sm:$0xff]
    %v793 = vld [vmem:[#allocation3 + $0x9] sm:$0xff]
    %v794 = vld [vmem:[#allocation3 + $0x19] sm:$0xff]
    %v795 = vld [vmem:[#allocation3 + $0x21] sm:$0xff]
    %s796 = scalar_lea.vmem %s4, 128
    %v797 = vld [vmem:[%s796] sm:$0xff]
    %v798 = vld [vmem:[%s796 + $0x8] sm:$0xff]
    %v799 = vld [vmem:[%s796 + $0x10] sm:$0xff]
    %v800 = vld [vmem:[%s796 + $0x18] sm:$0xff]
    %v801 = vld [vmem:[%s796 + $0x20] sm:$0xff]
    %v802 = vld [vmem:[%s796 + $0x28] sm:$0xff]
    %v803 = vld [vmem:[%s796 + $0x30] sm:$0xff]
    %v804 = vld [vmem:[%s796 + $0x38] sm:$0xff]
    %v805 = vld [vmem:[%s796 + $0x40] sm:$0xff]
    %v806 = vld [vmem:[%s796 + $0x48] sm:$0xff]
    %v807 = vld [vmem:[%s796 + $0x50] sm:$0xff]
    %v808 = vld [vmem:[%s796 + $0x58] sm:$0xff]
    %v809 = vld [vmem:[%s796 + $0x60] sm:$0xff]
    %v810 = vld [vmem:[%s796 + $0x68] sm:$0xff]
    %v811 = vld [vmem:[%s796 + $0x70] sm:$0xff]
    %v812 = vld [vmem:[%s796 + $0x78] sm:$0xff]
    %813 = vmatprep.subr.mxu0 0.0
    %814 = vmatpush1.msra.mxu0 %v797
    %815 = vmatprep.subr.mxu0 0.0
    %816 = vmatpush1.msra.mxu0 %v798
    %817 = vmatprep.subr.mxu0 0.0
    %818 = vmatpush1.msra.mxu0 %v799
    %819 = vmatprep.subr.mxu0 0.0
    %820 = vmatpush1.msra.mxu0 %v800
    %821 = vmatprep.subr.mxu0 0.0
    %822 = vmatpush1.msra.mxu0 %v801
    %823 = vmatprep.subr.mxu0 0.0
    %824 = vmatpush1.msra.mxu0 %v802
    %825 = vmatprep.subr.mxu0 0.0
    %826 = vmatpush1.msra.mxu0 %v803
    %827 = vmatprep.subr.mxu0 0.0
    %828 = vmatpush1.msra.mxu0 %v804
    %829 = vmatprep.subr.mxu0 0.0
    %830 = vmatpush1.msra.mxu0 %v805
    %831 = vmatprep.subr.mxu0 0.0
    %832 = vmatpush1.msra.mxu0 %v806
    %833 = vmatprep.subr.mxu0 0.0
    %834 = vmatpush1.msra.mxu0 %v807
    %835 = vmatprep.subr.mxu0 0.0
    %836 = vmatpush1.msra.mxu0 %v808
    %837 = vmatprep.subr.mxu0 0.0
    %838 = vmatpush1.msra.mxu0 %v809
    %839 = vmatprep.subr.mxu0 0.0
    %840 = vmatpush1.msra.mxu0 %v810
    %841 = vmatprep.subr.mxu0 0.0
    %842 = vmatpush1.msra.mxu0 %v811
    %843 = vmatprep.subr.mxu0 0.0
    %844 = vmatpush1.msra.mxu0 %v812
    %845 = vmatprep.subr.mxu0 0.0
    %846 = vmatpush1.msra.mxu0 0.0
    %847 = vmatprep.subr.mxu0 0.0
    %848 = vmatpush1.msra.mxu0 0.0
    %849 = vmatprep.subr.mxu0 0.0
    %850 = vmatpush1.msra.mxu0 0.0
    %851 = vmatprep.subr.mxu0 0.0
    %852 = vmatpush1.msra.mxu0 0.0
    %853 = vmatprep.subr.mxu0 0.0
    %854 = vmatpush1.msra.mxu0 0.0
    %855 = vmatprep.subr.mxu0 0.0
    %856 = vmatpush1.msra.mxu0 0.0
    %857 = vmatprep.subr.mxu0 0.0
    %858 = vmatpush1.msra.mxu0 0.0
    %859 = vmatprep.subr.mxu0 0.0
    %860 = vmatpush1.msra.mxu0 0.0
    %861 = vmatprep.subr.mxu0 0.0
    %862 = vmatpush1.msra.mxu0 0.0
    %863 = vmatprep.subr.mxu0 0.0
    %864 = vmatpush1.msra.mxu0 0.0
    %865 = vmatprep.subr.mxu0 0.0
    %866 = vmatpush1.msra.mxu0 0.0
    %867 = vmatprep.subr.mxu0 0.0
    %868 = vmatpush1.msra.mxu0 0.0
    %869 = vmatprep.subr.mxu0 0.0
    %870 = vmatpush1.msra.mxu0 0.0
    %871 = vmatprep.subr.mxu0 0.0
    %872 = vmatpush1.msra.mxu0 0.0
    %873 = vmatprep.subr.mxu0 0.0
    %874 = vmatpush1.msra.mxu0 0.0
    %875 = vmatprep.subr.mxu0 0.0
    %876 = vmatpush1.msra.mxu0 0.0
    %877 = vmatprep.mubr.f32.mxu0 0.0
    %878 = vmatmul.mubr.f32.gmra.mrb[0].mxu0 %v792
    %v879 = vpop.f32.mrb[0].mxu0
    %v880 = vadd.f32 0.0, %v879
    %v881 = vpop.f32.mrb[0].mxu0
    %882 = vmatprep.mubr.f32.mxu0 0.0
    %883 = vmatmul.mubr.f32.gmra.mrb[0].mxu0 %v793
    %v884 = vpop.f32.mrb[0].mxu0
    %v885 = vadd.f32 0.0, %v884
    %v886 = vpop.f32.mrb[0].mxu0
    %887 = vmatprep.mubr.f32.mxu0 0.0
    %888 = vmatmul.mubr.f32.gmra.mrb[0].mxu0 %v794
    %v889 = vpop.f32.mrb[0].mxu0
    %v890 = vadd.f32 0.0, %v889
    %v891 = vpop.f32.mrb[0].mxu0
    %892 = vmatprep.mubr.f32.mxu0 0.0
    %893 = vmatmul.mubr.f32.gmra.mrb[0].mxu0 %v795
    %v894 = vpop.f32.mrb[0].mxu0
    %v895 = vadd.f32 0.0, %v894
    %v896 = vpop.f32.mrb[0].mxu0
    %897 = vdwg.mxu0
    %898 = vmatprep.subr.mxu0 0.0
    %899 = vmatpush1.msra.mxu0 %v776
    %900 = vmatprep.subr.mxu0 0.0
    %901 = vmatpush1.msra.mxu0 %v777
    %902 = vmatprep.subr.mxu0 0.0
    %903 = vmatpush1.msra.mxu0 %v778
    %904 = vmatprep.subr.mxu0 0.0
    %905 = vmatpush1.msra.mxu0 %v779
    %906 = vmatprep.subr.mxu0 0.0
    %907 = vmatpush1.msra.mxu0 %v780
    %908 = vmatprep.subr.mxu0 0.0
    %909 = vmatpush1.msra.mxu0 %v781
    %910 = vmatprep.subr.mxu0 0.0
    %911 = vmatpush1.msra.mxu0 %v782
    %912 = vmatprep.subr.mxu0 0.0
    %913 = vmatpush1.msra.mxu0 %v783
    %914 = vmatprep.subr.mxu0 0.0
    %915 = vmatpush1.msra.mxu0 %v784
    %916 = vmatprep.subr.mxu0 0.0
    %917 = vmatpush1.msra.mxu0 %v785
    %918 = vmatprep.subr.mxu0 0.0
    %919 = vmatpush1.msra.mxu0 %v786
    %920 = vmatprep.subr.mxu0 0.0
    %921 = vmatpush1.msra.mxu0 %v787
    %922 = vmatprep.subr.mxu0 0.0
    %923 = vmatpush1.msra.mxu0 %v788
    %924 = vmatprep.subr.mxu0 0.0
    %925 = vmatpush1.msra.mxu0 %v789
    %926 = vmatprep.subr.mxu0 0.0
    %927 = vmatpush1.msra.mxu0 %v790
    %928 = vmatprep.subr.mxu0 0.0
    %929 = vmatpush1.msra.mxu0 %v791
    %930 = vmatprep.subr.mxu0 0.0
    %931 = vmatpush1.msra.mxu0 0.0
    %932 = vmatprep.subr.mxu0 0.0
    %933 = vmatpush1.msra.mxu0 0.0
    %934 = vmatprep.subr.mxu0 0.0
    %935 = vmatpush1.msra.mxu0 0.0
    %936 = vmatprep.subr.mxu0 0.0
    %937 = vmatpush1.msra.mxu0 0.0
    %938 = vmatprep.subr.mxu0 0.0
    %939 = vmatpush1.msra.mxu0 0.0
    %940 = vmatprep.subr.mxu0 0.0
    %941 = vmatpush1.msra.mxu0 0.0
    %942 = vmatprep.subr.mxu0 0.0
    %943 = vmatpush1.msra.mxu0 0.0
    %944 = vmatprep.subr.mxu0 0.0
    %945 = vmatpush1.msra.mxu0 0.0
    %946 = vmatprep.subr.mxu0 0.0
    %947 = vmatpush1.msra.mxu0 0.0
    %948 = vmatprep.subr.mxu0 0.0
    %949 = vmatpush1.msra.mxu0 0.0
    %950 = vmatprep.subr.mxu0 0.0
    %951 = vmatpush1.msra.mxu0 0.0
    %952 = vmatprep.subr.mxu0 0.0
    %953 = vmatpush1.msra.mxu0 0.0
    %954 = vmatprep.subr.mxu0 0.0
    %955 = vmatpush1.msra.mxu0 0.0
    %956 = vmatprep.subr.mxu0 0.0
    %957 = vmatpush1.msra.mxu0 0.0
    %958 = vmatprep.subr.mxu0 0.0
    %959 = vmatpush1.msra.mxu0 0.0
    %960 = vmatprep.subr.mxu0 0.0
    %961 = vmatpush1.msra.mxu0 0.0
    %962 = vmatprep.mubr.f32.mxu0 0.0
    %963 = vmatmul.mubr.f32.gmra.mrb[0].mxu0 %v772
    %v964 = vpop.f32.mrb[0].mxu0
    %v965 = vadd.f32 %v880, %v964
    %v966 = vpop.f32.mrb[0].mxu0
    %967 = vmatprep.mubr.f32.mxu0 0.0
    %968 = vmatmul.mubr.f32.gmra.mrb[0].mxu0 %v773
    %v969 = vpop.f32.mrb[0].mxu0
    %v970 = vadd.f32 %v885, %v969
    %v971 = vpop.f32.mrb[0].mxu0
    %972 = vmatprep.mubr.f32.mxu0 0.0
    %973 = vmatmul.mubr.f32.gmra.mrb[0].mxu0 %v774
    %v974 = vpop.f32.mrb[0].mxu0
    %v975 = vadd.f32 %v890, %v974
    %v976 = vpop.f32.mrb[0].mxu0
    %977 = vmatprep.mubr.f32.mxu0 0.0
    %978 = vmatmul.mubr.f32.gmra.mrb[0].mxu0 %v775
    %v979 = vpop.f32.mrb[0].mxu0
    %v980 = vadd.f32 %v895, %v979
    %v981 = vpop.f32.mrb[0].mxu0
    %982 = vdwg.mxu0
    %v983 = vld [vmem:[#allocation3 + $0x2] sm:$0xff]
    %v984 = vld [vmem:[#allocation3 + $0xa] sm:$0xff]
    %v985 = vld [vmem:[#allocation3 + $0x1a] sm:$0xff]
    %v986 = vld [vmem:[#allocation3 + $0x22] sm:$0xff]
    %s987 = scalar_lea.vmem %s4, 256
    %v988 = vld [vmem:[%s987] sm:$0xff]
    %v989 = vld [vmem:[%s987 + $0x8] sm:$0xff]
    %v990 = vld [vmem:[%s987 + $0x10] sm:$0xff]
    %v991 = vld [vmem:[%s987 + $0x18] sm:$0xff]
    %v992 = vld [vmem:[%s987 + $0x20] sm:$0xff]
    %v993 = vld [vmem:[%s987 + $0x28] sm:$0xff]
    %v994 = vld [vmem:[%s987 + $0x30] sm:$0xff]
    %v995 = vld [vmem:[%s987 + $0x38] sm:$0xff]
    %v996 = vld [vmem:[%s987 + $0x40] sm:$0xff]
    %v997 = vld [vmem:[%s987 + $0x48] sm:$0xff]
    %v998 = vld [vmem:[%s987 + $0x50] sm:$0xff]
    %v999 = vld [vmem:[%s987 + $0x58] sm:$0xff]
    %v1000 = vld [vmem:[%s987 + $0x60] sm:$0xff]
    %v1001 = vld [vmem:[%s987 + $0x68] sm:$0xff]
    %v1002 = vld [vmem:[%s987 + $0x70] sm:$0xff]
    %v1003 = vld [vmem:[%s987 + $0x78] sm:$0xff]
    %1004 = vmatprep.subr.mxu0 0.0
    %1005 = vmatpush1.msra.mxu0 %v988
    %1006 = vmatprep.subr.mxu0 0.0
    %1007 = vmatpush1.msra.mxu0 %v989
    %1008 = vmatprep.subr.mxu0 0.0
    %1009 = vmatpush1.msra.mxu0 %v990
    %1010 = vmatprep.subr.mxu0 0.0
    %1011 = vmatpush1.msra.mxu0 %v991
    %1012 = vmatprep.subr.mxu0 0.0
    %1013 = vmatpush1.msra.mxu0 %v992
    %1014 = vmatprep.subr.mxu0 0.0
    %1015 = vmatpush1.msra.mxu0 %v993
    %1016 = vmatprep.subr.mxu0 0.0
    %1017 = vmatpush1.msra.mxu0 %v994
    %1018 = vmatprep.subr.mxu0 0.0
    %1019 = vmatpush1.msra.mxu0 %v995
    %1020 = vmatprep.subr.mxu0 0.0
    %1021 = vmatpush1.msra.mxu0 %v996
    %1022 = vmatprep.subr.mxu0 0.0
    %1023 = vmatpush1.msra.mxu0 %v997
    %1024 = vmatprep.subr.mxu0 0.0
    %1025 = vmatpush1.msra.mxu0 %v998
    %1026 = vmatprep.subr.mxu0 0.0
    %1027 = vmatpush1.msra.mxu0 %v999
    %1028 = vmatprep.subr.mxu0 0.0
    %1029 = vmatpush1.msra.mxu0 %v1000
    %1030 = vmatprep.subr.mxu0 0.0
    %1031 = vmatpush1.msra.mxu0 %v1001
    %1032 = vmatprep.subr.mxu0 0.0
    %1033 = vmatpush1.msra.mxu0 %v1002
    %1034 = vmatprep.subr.mxu0 0.0
    %1035 = vmatpush1.msra.mxu0 %v1003
    %1036 = vmatprep.subr.mxu0 0.0
    %1037 = vmatpush1.msra.mxu0 0.0
    %1038 = vmatprep.subr.mxu0 0.0
    %1039 = vmatpush1.msra.mxu0 0.0
    %1040 = vmatprep.subr.mxu0 0.0
    %1041 = vmatpush1.msra.mxu0 0.0
    %1042 = vmatprep.subr.mxu0 0.0
    %1043 = vmatpush1.msra.mxu0 0.0
    %1044 = vmatprep.subr.mxu0 0.0
    %1045 = vmatpush1.msra.mxu0 0.0
    %1046 = vmatprep.subr.mxu0 0.0
    %1047 = vmatpush1.msra.mxu0 0.0
    %1048 = vmatprep.subr.mxu0 0.0
    %1049 = vmatpush1.msra.mxu0 0.0
    %1050 = vmatprep.subr.mxu0 0.0
    %1051 = vmatpush1.msra.mxu0 0.0
    %1052 = vmatprep.subr.mxu0 0.0
    %1053 = vmatpush1.msra.mxu0 0.0
    %1054 = vmatprep.subr.mxu0 0.0
    %1055 = vmatpush1.msra.mxu0 0.0
    %1056 = vmatprep.subr.mxu0 0.0
    %1057 = vmatpush1.msra.mxu0 0.0
    %1058 = vmatprep.subr.mxu0 0.0
    %1059 = vmatpush1.msra.mxu0 0.0
    %1060 = vmatprep.subr.mxu0 0.0
    %1061 = vmatpush1.msra.mxu0 0.0
    %1062 = vmatprep.subr.mxu0 0.0
    %1063 = vmatpush1.msra.mxu0 0.0
    %1064 = vmatprep.subr.mxu0 0.0
    %1065 = vmatpush1.msra.mxu0 0.0
    %1066 = vmatprep.subr.mxu0 0.0
    %1067 = vmatpush1.msra.mxu0 0.0
    %1068 = vmatprep.mubr.f32.mxu0 0.0
    %1069 = vmatmul.mubr.f32.gmra.mrb[0].mxu0 %v983
    %v1070 = vpop.f32.mrb[0].mxu0
    %v1071 = vadd.f32 0.0, %v1070
    %v1072 = vpop.f32.mrb[0].mxu0
    %1073 = vmatprep.mubr.f32.mxu0 0.0
    %1074 = vmatmul.mubr.f32.gmra.mrb[0].mxu0 %v984
    %v1075 = vpop.f32.mrb[0].mxu0
    %v1076 = vadd.f32 0.0, %v1075
    %v1077 = vpop.f32.mrb[0].mxu0
    %1078 = vmatprep.mubr.f32.mxu0 0.0
    %1079 = vmatmul.mubr.f32.gmra.mrb[0].mxu0 %v985
    %v1080 = vpop.f32.mrb[0].mxu0
    %v1081 = vadd.f32 0.0, %v1080
    %v1082 = vpop.f32.mrb[0].mxu0
    %1083 = vmatprep.mubr.f32.mxu0 0.0
    %1084 = vmatmul.mubr.f32.gmra.mrb[0].mxu0 %v986
    %v1085 = vpop.f32.mrb[0].mxu0
    %v1086 = vadd.f32 0.0, %v1085
    %v1087 = vpop.f32.mrb[0].mxu0
    %1088 = vdwg.mxu0
    %v1089 = vadd.f32 %v965, %v1071
    %v1090 = vadd.f32 %v970, %v1076
    %v1091 = vadd.f32 %v975, %v1081
    %v1092 = vadd.f32 %v980, %v1086
    %v1093 = vadd.f32 %v1089, %v1090
    %v1094 = vadd.f32 %v1093, %v1091
    %v1095 = vadd.f32 %v1094, %v1092
    %v1096 = vrot.slane %v1095, 4
    %v1097 = vadd.f32 %v1095, %v1096
    %v1098 = vrot.slane %v1097, 2
    %v1099 = vadd.f32 %v1097, %v1098
    %v1100 = vrot.slane %v1099, 1
    %v1101 = vadd.f32 %v1099, %v1100
    %v1102 = vmul.f32 %v1089, %v1089
    %v1103 = vmul.f32 %v1090, %v1090
    %v1104 = vmul.f32 %v1091, %v1091
    %v1105 = vmul.f32 %v1092, %v1092
    %v1106 = vadd.f32 %v1102, %v1103
    %v1107 = vadd.f32 %v1106, %v1104
    %v1108 = vadd.f32 %v1107, %v1105
    %v1109 = vrot.slane %v1108, 4
    %v1110 = vadd.f32 %v1108, %v1109
    %v1111 = vrot.slane %v1110, 2
    %v1112 = vadd.f32 %v1110, %v1111
    %v1113 = vrot.slane %v1112, 1
    %v1114 = vadd.f32 %v1112, %v1113
    %v1115 = vld [vmem:[#allocation6] sm:$0xff]
    %v1116 = vld [vmem:[#allocation6 + $0x8] sm:$0xff]
    %v1117 = vld [vmem:[#allocation6 + $0x10] sm:$0xff]
    %v1118 = vld [vmem:[#allocation6 + $0x18] sm:$0xff]
    %v1119 = vld [vmem:[#allocation6 + $0x20] sm:$0xff]
    %v1120 = vld [vmem:[#allocation6 + $0x28] sm:$0xff]
    %v1121 = vld [vmem:[#allocation6 + $0x30] sm:$0xff]
    %v1122 = vld [vmem:[#allocation6 + $0x38] sm:$0xff]
    %v1123 = vld [vmem:[#allocation6 + $0x40] sm:$0xff]
    %v1124 = vld [vmem:[#allocation6 + $0x48] sm:$0xff]
    %v1125 = vld [vmem:[#allocation6 + $0x50] sm:$0xff]
    %v1126 = vld [vmem:[#allocation6 + $0x58] sm:$0xff]
    %v1127 = vld [vmem:[#allocation6 + $0x60] sm:$0xff]
    %v1128 = vld [vmem:[#allocation6 + $0x68] sm:$0xff]
    %v1129 = vld [vmem:[#allocation6 + $0x70] sm:$0xff]
    %v1130 = vld [vmem:[#allocation6 + $0x78] sm:$0xff]
    %1131 = vmatprep.subr.mxu0 0.0
    %1132 = vmatpush1.msra.mxu0 %v1115
    %1133 = vmatprep.subr.mxu0 0.0
    %1134 = vmatpush1.msra.mxu0 %v1116
    %1135 = vmatprep.subr.mxu0 0.0
    %1136 = vmatpush1.msra.mxu0 %v1117
    %1137 = vmatprep.subr.mxu0 0.0
    %1138 = vmatpush1.msra.mxu0 %v1118
    %1139 = vmatprep.subr.mxu0 0.0
    %1140 = vmatpush1.msra.mxu0 %v1119
    %1141 = vmatprep.subr.mxu0 0.0
    %1142 = vmatpush1.msra.mxu0 %v1120
    %1143 = vmatprep.subr.mxu0 0.0
    %1144 = vmatpush1.msra.mxu0 %v1121
    %1145 = vmatprep.subr.mxu0 0.0
    %1146 = vmatpush1.msra.mxu0 %v1122
    %1147 = vmatprep.subr.mxu0 0.0
    %1148 = vmatpush1.msra.mxu0 %v1123
    %1149 = vmatprep.subr.mxu0 0.0
    %1150 = vmatpush1.msra.mxu0 %v1124
    %1151 = vmatprep.subr.mxu0 0.0
    %1152 = vmatpush1.msra.mxu0 %v1125
    %1153 = vmatprep.subr.mxu0 0.0
    %1154 = vmatpush1.msra.mxu0 %v1126
    %1155 = vmatprep.subr.mxu0 0.0
    %1156 = vmatpush1.msra.mxu0 %v1127
    %1157 = vmatprep.subr.mxu0 0.0
    %1158 = vmatpush1.msra.mxu0 %v1128
    %1159 = vmatprep.subr.mxu0 0.0
    %1160 = vmatpush1.msra.mxu0 %v1129
    %1161 = vmatprep.subr.mxu0 0.0
    %1162 = vmatpush1.msra.mxu0 %v1130
    %1163 = vmatprep.subr.mxu0 0.0
    %1164 = vmatpush1.msra.mxu0 0.0
    %1165 = vmatprep.subr.mxu0 0.0
    %1166 = vmatpush1.msra.mxu0 0.0
    %1167 = vmatprep.subr.mxu0 0.0
    %1168 = vmatpush1.msra.mxu0 0.0
    %1169 = vmatprep.subr.mxu0 0.0
    %1170 = vmatpush1.msra.mxu0 0.0
    %1171 = vmatprep.subr.mxu0 0.0
    %1172 = vmatpush1.msra.mxu0 0.0
    %1173 = vmatprep.subr.mxu0 0.0
    %1174 = vmatpush1.msra.mxu0 0.0
    %1175 = vmatprep.subr.mxu0 0.0
    %1176 = vmatpush1.msra.mxu0 0.0
    %1177 = vmatprep.subr.mxu0 0.0
    %1178 = vmatpush1.msra.mxu0 0.0
    %1179 = vmatprep.subr.mxu0 0.0
    %1180 = vmatpush1.msra.mxu0 0.0
    %1181 = vmatprep.subr.mxu0 0.0
    %1182 = vmatpush1.msra.mxu0 0.0
    %1183 = vmatprep.subr.mxu0 0.0
    %1184 = vmatpush1.msra.mxu0 0.0
    %1185 = vmatprep.subr.mxu0 0.0
    %1186 = vmatpush1.msra.mxu0 0.0
    %1187 = vmatprep.subr.mxu0 0.0
    %1188 = vmatpush1.msra.mxu0 0.0
    %1189 = vmatprep.subr.mxu0 0.0
    %1190 = vmatpush1.msra.mxu0 0.0
    %1191 = vmatprep.subr.mxu0 0.0
    %1192 = vmatpush1.msra.mxu0 0.0
    %1193 = vmatprep.subr.mxu0 0.0
    %1194 = vmatpush1.msra.mxu0 0.0
    %1195 = vmatprep.mubr.f32.mxu0 0.0
    %1196 = vmatmul.mubr.f32.gmra.mrb[0].mxu0 %v1101
    %v1197 = vpop.f32.mrb[0].mxu0
    %v1198 = vadd.f32 0.0, %v1197
    %v1199 = vpop.f32.mrb[0].mxu0
    %1200 = vdwg.mxu0
    %1201 = vmatprep.subr.mxu0 0.0
    %1202 = vmatpush1.msra.mxu0 %v1115
    %1203 = vmatprep.subr.mxu0 0.0
    %1204 = vmatpush1.msra.mxu0 %v1116
    %1205 = vmatprep.subr.mxu0 0.0
    %1206 = vmatpush1.msra.mxu0 %v1117
    %1207 = vmatprep.subr.mxu0 0.0
    %1208 = vmatpush1.msra.mxu0 %v1118
    %1209 = vmatprep.subr.mxu0 0.0
    %1210 = vmatpush1.msra.mxu0 %v1119
    %1211 = vmatprep.subr.mxu0 0.0
    %1212 = vmatpush1.msra.mxu0 %v1120
    %1213 = vmatprep.subr.mxu0 0.0
    %1214 = vmatpush1.msra.mxu0 %v1121
    %1215 = vmatprep.subr.mxu0 0.0
    %1216 = vmatpush1.msra.mxu0 %v1122
    %1217 = vmatprep.subr.mxu0 0.0
    %1218 = vmatpush1.msra.mxu0 %v1123
    %1219 = vmatprep.subr.mxu0 0.0
    %1220 = vmatpush1.msra.mxu0 %v1124
    %1221 = vmatprep.subr.mxu0 0.0
    %1222 = vmatpush1.msra.mxu0 %v1125
    %1223 = vmatprep.subr.mxu0 0.0
    %1224 = vmatpush1.msra.mxu0 %v1126
    %1225 = vmatprep.subr.mxu0 0.0
    %1226 = vmatpush1.msra.mxu0 %v1127
    %1227 = vmatprep.subr.mxu0 0.0
    %1228 = vmatpush1.msra.mxu0 %v1128
    %1229 = vmatprep.subr.mxu0 0.0
    %1230 = vmatpush1.msra.mxu0 %v1129
    %1231 = vmatprep.subr.mxu0 0.0
    %1232 = vmatpush1.msra.mxu0 %v1130
    %1233 = vmatprep.subr.mxu0 0.0
    %1234 = vmatpush1.msra.mxu0 0.0
    %1235 = vmatprep.subr.mxu0 0.0
    %1236 = vmatpush1.msra.mxu0 0.0
    %1237 = vmatprep.subr.mxu0 0.0
    %1238 = vmatpush1.msra.mxu0 0.0
    %1239 = vmatprep.subr.mxu0 0.0
    %1240 = vmatpush1.msra.mxu0 0.0
    %1241 = vmatprep.subr.mxu0 0.0
    %1242 = vmatpush1.msra.mxu0 0.0
    %1243 = vmatprep.subr.mxu0 0.0
    %1244 = vmatpush1.msra.mxu0 0.0
    %1245 = vmatprep.subr.mxu0 0.0
    %1246 = vmatpush1.msra.mxu0 0.0
    %1247 = vmatprep.subr.mxu0 0.0
    %1248 = vmatpush1.msra.mxu0 0.0
    %1249 = vmatprep.subr.mxu0 0.0
    %1250 = vmatpush1.msra.mxu0 0.0
    %1251 = vmatprep.subr.mxu0 0.0
    %1252 = vmatpush1.msra.mxu0 0.0
    %1253 = vmatprep.subr.mxu0 0.0
    %1254 = vmatpush1.msra.mxu0 0.0
    %1255 = vmatprep.subr.mxu0 0.0
    %1256 = vmatpush1.msra.mxu0 0.0
    %1257 = vmatprep.subr.mxu0 0.0
    %1258 = vmatpush1.msra.mxu0 0.0
    %1259 = vmatprep.subr.mxu0 0.0
    %1260 = vmatpush1.msra.mxu0 0.0
    %1261 = vmatprep.subr.mxu0 0.0
    %1262 = vmatpush1.msra.mxu0 0.0
    %1263 = vmatprep.subr.mxu0 0.0
    %1264 = vmatpush1.msra.mxu0 0.0
    %1265 = vmatprep.mubr.f32.mxu0 0.0
    %1266 = vmatmul.mubr.f32.gmra.mrb[0].mxu0 %v1114
    %v1267 = vpop.f32.mrb[0].mxu0
    %v1268 = vadd.f32 0.0, %v1267
    %v1269 = vpop.f32.mrb[0].mxu0
    %1270 = vdwg.mxu0
    %v1271 = vmul.f32 %v1198, 0.001953125
    %v1272 = vmul.f32 %v1268, 0.001953125
    %v1273 = vmul.f32 %v1271, %v1271
    %v1274 = vsub.f32 %v1272, %v1273
    %v1275 = vadd.f32 %v1274, 1e-05
    %v1276 = vrsqrt.pop %v1275
    %v1277 = vld [vmem:[%s5] sm:$0x1]
    %v1278 = vmul.f32 %v1276, %v1277
    %v1279 = vld [vmem:[%s6] sm:$0x1]
    %v1280 = vmul.f32 %v1271, %v1278
    %v1281 = vsub.f32 %v1279, %v1280
    %v1282 = vld [vmem:[%s8] sm:$0xff]
    %v1284 = vsel %vm597, %v1278, 0
    %1286 = vmatprep.subr.mxu0 0.0
    %1287 = vmatpush1.msra.mxu0 %v1282
    %1288 = vmatprep.subr.mxu0 0.0
    %1289 = vmatpush1.msra.mxu0 0.0
    %1290 = vmatprep.subr.mxu0 0.0
    %1291 = vmatpush1.msra.mxu0 0.0
    %1292 = vmatprep.subr.mxu0 0.0
    %1293 = vmatpush1.msra.mxu0 0.0
    %1294 = vmatprep.subr.mxu0 0.0
    %1295 = vmatpush1.msra.mxu0 0.0
    %1296 = vmatprep.subr.mxu0 0.0
    %1297 = vmatpush1.msra.mxu0 0.0
    %1298 = vmatprep.subr.mxu0 0.0
    %1299 = vmatpush1.msra.mxu0 0.0
    %1300 = vmatprep.subr.mxu0 0.0
    %1301 = vmatpush1.msra.mxu0 0.0
    %1302 = vmatprep.subr.mxu0 0.0
    %1303 = vmatpush1.msra.mxu0 0.0
    %1304 = vmatprep.subr.mxu0 0.0
    %1305 = vmatpush1.msra.mxu0 0.0
    %1306 = vmatprep.subr.mxu0 0.0
    %1307 = vmatpush1.msra.mxu0 0.0
    %1308 = vmatprep.subr.mxu0 0.0
    %1309 = vmatpush1.msra.mxu0 0.0
    %1310 = vmatprep.subr.mxu0 0.0
    %1311 = vmatpush1.msra.mxu0 0.0
    %1312 = vmatprep.subr.mxu0 0.0
    %1313 = vmatpush1.msra.mxu0 0.0
    %1314 = vmatprep.subr.mxu0 0.0
    %1315 = vmatpush1.msra.mxu0 0.0
    %1316 = vmatprep.subr.mxu0 0.0
    %1317 = vmatpush1.msra.mxu0 0.0
    %1318 = vmatprep.subr.mxu0 0.0
    %1319 = vmatpush1.msra.mxu0 0.0
    %1320 = vmatprep.subr.mxu0 0.0
    %1321 = vmatpush1.msra.mxu0 0.0
    %1322 = vmatprep.subr.mxu0 0.0
    %1323 = vmatpush1.msra.mxu0 0.0
    %1324 = vmatprep.subr.mxu0 0.0
    %1325 = vmatpush1.msra.mxu0 0.0
    %1326 = vmatprep.subr.mxu0 0.0
    %1327 = vmatpush1.msra.mxu0 0.0
    %1328 = vmatprep.subr.mxu0 0.0
    %1329 = vmatpush1.msra.mxu0 0.0
    %1330 = vmatprep.subr.mxu0 0.0
    %1331 = vmatpush1.msra.mxu0 0.0
    %1332 = vmatprep.subr.mxu0 0.0
    %1333 = vmatpush1.msra.mxu0 0.0
    %1334 = vmatprep.subr.mxu0 0.0
    %1335 = vmatpush1.msra.mxu0 0.0
    %1336 = vmatprep.subr.mxu0 0.0
    %1337 = vmatpush1.msra.mxu0 0.0
    %1338 = vmatprep.subr.mxu0 0.0
    %1339 = vmatpush1.msra.mxu0 0.0
    %1340 = vmatprep.subr.mxu0 0.0
    %1341 = vmatpush1.msra.mxu0 0.0
    %1342 = vmatprep.subr.mxu0 0.0
    %1343 = vmatpush1.msra.mxu0 0.0
    %1344 = vmatprep.subr.mxu0 0.0
    %1345 = vmatpush1.msra.mxu0 0.0
    %1346 = vmatprep.subr.mxu0 0.0
    %1347 = vmatpush1.msra.mxu0 0.0
    %1348 = vmatprep.subr.mxu0 0.0
    %1349 = vmatpush1.msra.mxu0 0.0
    %1350 = vmatprep.mubr.f32.mxu0 0.0
    %1351 = vmatmul.mubr.f32.gmra.mrb[0].mxu0 %v1284
    %v1352 = vpop.f32.mrb[0].mxu0
    %v1353 = vadd.f32 0.0, %v1352
    %v1354 = vpop.f32.mrb[0].mxu0
    %1355 = vdwg.mxu0
    %v1357 = vsel %vm597, %v1281, 0
    %1359 = vmatprep.subr.mxu0 0.0
    %1360 = vmatpush1.msra.mxu0 %v1282
    %1361 = vmatprep.subr.mxu0 0.0
    %1362 = vmatpush1.msra.mxu0 0.0
    %1363 = vmatprep.subr.mxu0 0.0
    %1364 = vmatpush1.msra.mxu0 0.0
    %1365 = vmatprep.subr.mxu0 0.0
    %1366 = vmatpush1.msra.mxu0 0.0
    %1367 = vmatprep.subr.mxu0 0.0
    %1368 = vmatpush1.msra.mxu0 0.0
    %1369 = vmatprep.subr.mxu0 0.0
    %1370 = vmatpush1.msra.mxu0 0.0
    %1371 = vmatprep.subr.mxu0 0.0
    %1372 = vmatpush1.msra.mxu0 0.0
    %1373 = vmatprep.subr.mxu0 0.0
    %1374 = vmatpush1.msra.mxu0 0.0
    %1375 = vmatprep.subr.mxu0 0.0
    %1376 = vmatpush1.msra.mxu0 0.0
    %1377 = vmatprep.subr.mxu0 0.0
    %1378 = vmatpush1.msra.mxu0 0.0
    %1379 = vmatprep.subr.mxu0 0.0
    %1380 = vmatpush1.msra.mxu0 0.0
    %1381 = vmatprep.subr.mxu0 0.0
    %1382 = vmatpush1.msra.mxu0 0.0
    %1383 = vmatprep.subr.mxu0 0.0
    %1384 = vmatpush1.msra.mxu0 0.0
    %1385 = vmatprep.subr.mxu0 0.0
    %1386 = vmatpush1.msra.mxu0 0.0
    %1387 = vmatprep.subr.mxu0 0.0
    %1388 = vmatpush1.msra.mxu0 0.0
    %1389 = vmatprep.subr.mxu0 0.0
    %1390 = vmatpush1.msra.mxu0 0.0
    %1391 = vmatprep.subr.mxu0 0.0
    %1392 = vmatpush1.msra.mxu0 0.0
    %1393 = vmatprep.subr.mxu0 0.0
    %1394 = vmatpush1.msra.mxu0 0.0
    %1395 = vmatprep.subr.mxu0 0.0
    %1396 = vmatpush1.msra.mxu0 0.0
    %1397 = vmatprep.subr.mxu0 0.0
    %1398 = vmatpush1.msra.mxu0 0.0
    %1399 = vmatprep.subr.mxu0 0.0
    %1400 = vmatpush1.msra.mxu0 0.0
    %1401 = vmatprep.subr.mxu0 0.0
    %1402 = vmatpush1.msra.mxu0 0.0
    %1403 = vmatprep.subr.mxu0 0.0
    %1404 = vmatpush1.msra.mxu0 0.0
    %1405 = vmatprep.subr.mxu0 0.0
    %1406 = vmatpush1.msra.mxu0 0.0
    %1407 = vmatprep.subr.mxu0 0.0
    %1408 = vmatpush1.msra.mxu0 0.0
    %1409 = vmatprep.subr.mxu0 0.0
    %1410 = vmatpush1.msra.mxu0 0.0
    %1411 = vmatprep.subr.mxu0 0.0
    %1412 = vmatpush1.msra.mxu0 0.0
    %1413 = vmatprep.subr.mxu0 0.0
    %1414 = vmatpush1.msra.mxu0 0.0
    %1415 = vmatprep.subr.mxu0 0.0
    %1416 = vmatpush1.msra.mxu0 0.0
    %1417 = vmatprep.subr.mxu0 0.0
    %1418 = vmatpush1.msra.mxu0 0.0
    %1419 = vmatprep.subr.mxu0 0.0
    %1420 = vmatpush1.msra.mxu0 0.0
    %1421 = vmatprep.subr.mxu0 0.0
    %1422 = vmatpush1.msra.mxu0 0.0
    %1423 = vmatprep.mubr.f32.mxu0 0.0
    %1424 = vmatmul.mubr.f32.gmra.mrb[0].mxu0 %v1357
    %v1425 = vpop.f32.mrb[0].mxu0
    %v1426 = vadd.f32 0.0, %v1425
    %v1427 = vpop.f32.mrb[0].mxu0
    %1428 = vdwg.mxu0
    %v1429 = vlaneseq
    %v1430 = vshrl.u32 %v1429, 7
    %v1431 = vsub.s32 0, %v1430
    %v1432 = vrot.slane %v1353, %v1431
    %v1433 = vmul.f32 %v1089, %v1432
    %v1434 = vmul.f32 %v1090, %v1432
    %v1435 = vmul.f32 %v1091, %v1432
    %v1436 = vmul.f32 %v1092, %v1432
    %v1437 = vlaneseq
    %v1438 = vshrl.u32 %v1437, 7
    %v1439 = vsub.s32 0, %v1438
    %v1440 = vrot.slane %v1426, %v1439
    %v1441 = vadd.f32 %v1433, %v1440
    %v1442 = vadd.f32 %v1434, %v1440
    %v1443 = vadd.f32 %v1435, %v1440
    %v1444 = vadd.f32 %v1436, %v1440
    %v1445 = vmax.f32 %v1441, 0.0
    %v1446 = vmax.f32 %v1442, 0.0
    %v1447 = vmax.f32 %v1443, 0.0
    %v1448 = vmax.f32 %v1444, 0.0
    %1449 = vst [vmem:[%s9] sm:$0xff] %v1445
    %1450 = vst [vmem:[%s9 + $0x8] sm:$0xff] %v1446
    %1451 = vst [vmem:[%s9 + $0x10] sm:$0xff] %v1447
    %1452 = vst [vmem:[%s9 + $0x18] sm:$0xff] %v1448
    // Predicated region
    $region46: #{forward.1} parent=1 // pred_check
      _
    $region47: #{forward.1} parent=1 // pred_check_branch
      %1454 = sbr.rel (0) target = $region49
    $region48: #{forward.1} parent=1 // pred_region
      _
    $region49: #{forward.1} parent=1 // pred_fallthru
      _
    // Predicated region
    $region50: #{forward.1} parent=1 // pred_check
      _
    $region51: #{forward.1} parent=1 // pred_check_branch
      %1456 = sbr.rel (0) target = $region53
    $region52: #{forward.1} parent=1 // pred_region
      _
    $region53: #{forward.1} parent=1 // pred_fallthru
      _
    %1457 = vsyncpa [#allocation5], 1
    %1458 = vsyncpa [#allocation7], 1

</llo_original>
